<compile_context>
chip_gen: v7x
topology: tpu7x:2x2x1
jax: 0.10.0
libtpu: 0.0.40
codegen_flags: <defaults>
</compile_context>

<pallas_src>
import jax
import jax.numpy as jnp
from jax import lax
from jax.experimental import pallas as pl
from jax.experimental.pallas import tpu as pltpu


# ---------------------------------------------------------------------------
# Pallas kernel
# ---------------------------------------------------------------------------
def seq2seq_kernel(x_ref,                     # (B, T, D)
                   ewi_ref, ewh_ref, eb_ref,  # encoder: (D,4H), (H,4H), (1,4H)
                   dwi_ref, dwh_ref, db_ref,  # decoder: (H,4H), (H,4H), (1,4H)
                   fcw_ref, fcb_ref,          # fc:      (H,O),  (1,O)
                   out_ref,                   # (B, O)
                   gx_ref):                   # VMEM scratch (B, T, 4H) f32
    B, T, D = x_ref.shape
    G = ewh_ref.shape[1]          # 4H
    H = G // 4
    cdt = ewi_ref.dtype           # compute (matmul operand) dtype: f32 or bf16

    x = x_ref[...]                # (B, T, D)

    # ---- hoisted input projection: one big MXU matmul, bias folded in -------
    gx = jnp.dot(x.reshape(B * T, D), ewi_ref[...],
                 preferred_element_type=jnp.float32) + eb_ref[...]
    gx_ref[...] = gx.reshape(B, T, G)          # (B, T, 4H) f32

    def gate_math(pre, c):
        # columns pre-permuted to [i, f, o, g]:
        # single sigmoid over a lane-dense 3H slab + single tanh over the last H
        sig = jax.nn.sigmoid(pre[:, : 3 * H])
        i = sig[:, 0 * H:1 * H]
        f = sig[:, 1 * H:2 * H]
        o = sig[:, 2 * H:3 * H]
        g = jnp.tanh(pre[:, 3 * H:])
        c_new = f * c + i * g
        h_new = o * jnp.tanh(c_new)
        return h_new, c_new

    # ---- encoder recurrence: only h @ W_hh + elementwise per step -----------
    def body(t, carry):
        h, c = carry
        g_t = gx_ref[:, pl.ds(t, 1), :].reshape(B, G)          # precomputed x@Wi+b
        pre = g_t + jnp.dot(h.astype(cdt), ewh_ref[...],
                            preferred_element_type=jnp.float32)
        return gate_math(pre, c)

    h0 = jnp.zeros((B, H), jnp.float32)
    c0 = jnp.zeros((B, H), jnp.float32)
    unroll = True if T <= 8 else 8             # bounded unroll for large T
    h, c = lax.fori_loop(0, T, body, (h0, c0), unroll=unroll)

    # ---- decoder: single LSTM step on x[:, -1, :] with encoder (h, c) -------
    dec_in = x[:, T - 1, :]                    # (B, D)
    pre_d = (jnp.dot(dec_in, dwi_ref[...], preferred_element_type=jnp.float32)
             + jnp.dot(h.astype(cdt), dwh_ref[...],
                       preferred_element_type=jnp.float32)
             + db_ref[...])
    h_dec, _ = gate_math(pre_d, c)

    # ---- fc ------------------------------------------------------------------
    out_ref[...] = (jnp.dot(h_dec.astype(fcw_ref.dtype), fcw_ref[...],
                            preferred_element_type=jnp.float32)
                    + fcb_ref[...]).astype(out_ref.dtype)


# ---------------------------------------------------------------------------
# Wrapper: layout plumbing (gate-column permutation, transposes) + pallas_call
# ---------------------------------------------------------------------------
def _permute_gate_cols(w):
    # last-axis columns in PyTorch order [i, f, g, o] -> kernel order [i, f, o, g]
    G = w.shape[-1]
    H = G // 4
    return jnp.concatenate(
        [w[..., : 2 * H], w[..., 3 * H:], w[..., 2 * H: 3 * H]], axis=-1)


def seq2seq_forward(x, params, compute_dtype=jnp.float32):
    B, T, D = x.shape
    H = params["enc_whh"].shape[1]
    O = params["fc_w"].shape[0]
    assert D == params["enc_wih"].shape[1]
    # decoder's LSTM input size is H; the module feeds it x[:, -1:, :] so D == H
    assert D == H

    cdt = compute_dtype
    # matmul operands may be bf16 (v6e/v7x); biases stay f32 (added post-accum)
    ewi = _permute_gate_cols(jnp.transpose(params["enc_wih"])).astype(cdt)   # (D,4H)
    ewh = _permute_gate_cols(jnp.transpose(params["enc_whh"])).astype(cdt)   # (H,4H)
    eb = _permute_gate_cols(
        (params["enc_bih"] + params["enc_bhh"]).reshape(1, 4 * H)).astype(jnp.float32)
    dwi = _permute_gate_cols(jnp.transpose(params["dec_wih"])).astype(cdt)   # (H,4H)
    dwh = _permute_gate_cols(jnp.transpose(params["dec_whh"])).astype(cdt)   # (H,4H)
    db = _permute_gate_cols(
        (params["dec_bih"] + params["dec_bhh"]).reshape(1, 4 * H)).astype(jnp.float32)
    fcw = jnp.transpose(params["fc_w"]).astype(cdt)                          # (H,O)
    fcb = params["fc_b"].reshape(1, O).astype(jnp.float32)
    x_in = x.astype(cdt)                       # (B, T, D) — no transpose / HBM pass

    vmem = pl.BlockSpec(memory_space=pltpu.MemorySpace.VMEM)
    out = pl.pallas_call(
        seq2seq_kernel,
        out_shape=jax.ShapeDtypeStruct((B, O), jnp.float32),
        in_specs=[vmem] * 9,
        out_specs=vmem,
        scratch_shapes=[pltpu.VMEM((B, T, 4 * H), jnp.float32)],
    )(x_in, ewi, ewh, eb, dwi, dwh, db, fcw, fcb)
    # TODO(synk): for very long T, stream x/gx with a gridded BlockSpec over T-chunks
    # (mandatory on v7x's 64 MiB VMEM); whole-sequence-resident is fine at these sizes.
    return out.reshape(B, 1, O)                # matches torch output (B, 1, output_size)


# ---------------------------------------------------------------------------
# Pure-JAX reference (mirrors torch.nn.LSTM single-layer semantics)
# ---------------------------------------------------------------------------
def _lstm_cell_ref(x_t, h, c, wih, whh, bih, bhh):
    H = whh.shape[1]
    g = x_t @ wih.T + bih + h @ whh.T + bhh
    i = jax.nn.sigmoid(g[:, 0 * H:1 * H])
    f = jax.nn.sigmoid(g[:, 1 * H:2 * H])
    gg = jnp.tanh(g[:, 2 * H:3 * H])
    o = jax.nn.sigmoid(g[:, 3 * H:4 * H])
    c = f * c + i * gg
    h = o * jnp.tanh(c)
    return h, c


def seq2seq_reference(x, p):
    B, T, D = x.shape
    H = p["enc_whh"].shape[1]
    h = jnp.zeros((B, H), jnp.float32)
    c = jnp.zeros((B, H), jnp.float32)
    for t in range(T):
        h, c = _lstm_cell_ref(x[:, t, :], h, c,
                              p["enc_wih"], p["enc_whh"], p["enc_bih"], p["enc_bhh"])
    dec_in = x[:, -1, :]
    h, c = _lstm_cell_ref(dec_in, h, c,
                          p["dec_wih"], p["dec_whh"], p["dec_bih"], p["dec_bhh"])
    out = h @ p["fc_w"].T + p["fc_b"]
    return out.reshape(B, 1, -1)


# ---------------------------------------------------------------------------
# Deterministic parameter init (shapes match nn.LSTM / nn.Linear)
# ---------------------------------------------------------------------------
def init_params(key, input_size, hidden_size, output_size):
    H, D, O = hidden_size, input_size, output_size
    k = 1.0 / jnp.sqrt(jnp.float32(H))
    keys = jax.random.split(key, 10)
    u = lambda kk, shape: jax.random.uniform(kk, shape, jnp.float32, -k, k)
    return {
        "enc_wih": u(keys[0], (4 * H, D)),
        "enc_whh": u(keys[1], (4 * H, H)),
        "enc_bih": u(keys[2], (4 * H,)),
        "enc_bhh": u(keys[3], (4 * H,)),
        "dec_wih": u(keys[4], (4 * H, H)),
        "dec_whh": u(keys[5], (4 * H, H)),
        "dec_bih": u(keys[6], (4 * H,)),
        "dec_bhh": u(keys[7], (4 * H,)),
        "fc_w":    u(keys[8], (O, H)),
        "fc_b":    u(keys[9], (O,)),
    }


if __name__ == "__main__":
    # small shapes implied by the forward: (batch, seq_len, input_size)
    B, T = 2, 8
    input_size = hidden_size = 32     # must match (see layout note)
    output_size = 16

    key = jax.random.PRNGKey(0)
    pkey, xkey = jax.random.split(key)
    params = init_params(pkey, input_size, hidden_size, output_size)
    x = jax.random.normal(xkey, (B, T, input_size), jnp.float32)

    out = seq2seq_forward(x, params)          # f32 path for exact validation
    out = jax.block_until_ready(out)

    ref = seq2seq_reference(x, params)
    assert out.shape == (B, 1, output_size)
    assert jnp.allclose(out, ref, atol=1e-5, rtol=1e-5), (
        f"max abs err {jnp.max(jnp.abs(out - ref))}")

    print("KERNEL_OK")
</pallas_src>

<mosaic_0001>
module attributes {stable_mosaic.version = 11 : i64} {
  func.func @seq2seq_kernel(%arg0: memref<2x8x32xf32, #tpu.memory_space<vmem>>, %arg1: memref<32x128xf32, #tpu.memory_space<vmem>>, %arg2: memref<32x128xf32, #tpu.memory_space<vmem>>, %arg3: memref<1x128xf32, #tpu.memory_space<vmem>>, %arg4: memref<32x128xf32, #tpu.memory_space<vmem>>, %arg5: memref<32x128xf32, #tpu.memory_space<vmem>>, %arg6: memref<1x128xf32, #tpu.memory_space<vmem>>, %arg7: memref<32x16xf32, #tpu.memory_space<vmem>>, %arg8: memref<1x16xf32, #tpu.memory_space<vmem>>, %arg9: memref<2x16xf32, #tpu.memory_space<vmem>>, %arg10: memref<2x8x128xf32, #tpu.memory_space<vmem>>) attributes {dimension_semantics = [], scalar_prefetch = 0 : i64, scratch_operands = 1 : i64, tpu.core_type = #tpu.core_type<tc>} {
    %c0 = arith.constant 0 : index
    %c0_0 = arith.constant 0 : index
    %c0_1 = arith.constant 0 : index
    %0 = vector.load %arg0[%c0, %c0_0, %c0_1] : memref<2x8x32xf32, #tpu.memory_space<vmem>>, vector<2x8x32xf32>
    %1 = vector.shape_cast %0 : vector<2x8x32xf32> to vector<16x32xf32>
    %c0_2 = arith.constant 0 : index
    %c0_3 = arith.constant 0 : index
    %2 = vector.load %arg1[%c0_2, %c0_3] : memref<32x128xf32, #tpu.memory_space<vmem>>, vector<32x128xf32>
    %cst = arith.constant dense<0.000000e+00> : vector<16x128xf32>
    %3 = tpu.matmul %1, %2, %cst {dimension_numbers = #tpu.dot_dimension_numbers<[1], [0], [0], [1], [0, 0, 1, 1], [], []>} : vector<16x32xf32>, vector<32x128xf32>, vector<16x128xf32> -> vector<16x128xf32>
    %c0_4 = arith.constant 0 : index
    %c0_5 = arith.constant 0 : index
    %4 = vector.load %arg3[%c0_4, %c0_5] : memref<1x128xf32, #tpu.memory_space<vmem>>, vector<1x128xf32>
    %5 = vector.broadcast %4 : vector<1x128xf32> to vector<16x128xf32>
    %6 = arith.addf %3, %5 : vector<16x128xf32>
    %7 = vector.shape_cast %6 : vector<16x128xf32> to vector<2x8x128xf32>
    %c0_6 = arith.constant 0 : index
    %c0_7 = arith.constant 0 : index
    %c0_8 = arith.constant 0 : index
    %8 = vector.load %arg10[%c0_6, %c0_7, %c0_8] : memref<2x8x128xf32, #tpu.memory_space<vmem>>, vector<2x8x128xf32>
    tpu.vector_store %arg10[%c0_6, %c0_7, %c0_8], %7 {strides = array<i32>} : memref<2x8x128xf32, #tpu.memory_space<vmem>>, vector<2x8x128xf32>,
    %cst_9 = arith.constant 0.000000e+00 : f32
    %9 = vector.broadcast %cst_9 : f32 to vector<2x32xf32>
    %cst_10 = arith.constant 0.000000e+00 : f32
    %10 = vector.broadcast %cst_10 : f32 to vector<2x32xf32>
    %c0_i32 = arith.constant 0 : i32
    %c0_11 = arith.constant 0 : index
    %11 = arith.index_cast %c0_i32 : i32 to index
    %c0_12 = arith.constant 0 : index
    %12 = vector.load %arg10[%c0_11, %11, %c0_12] : memref<2x8x128xf32, #tpu.memory_space<vmem>>, vector<2x1x128xf32>
    %13 = vector.shape_cast %12 : vector<2x1x128xf32> to vector<2x128xf32>
    %c0_13 = arith.constant 0 : index
    %c0_14 = arith.constant 0 : index
    %14 = vector.load %arg2[%c0_13, %c0_14] : memref<32x128xf32, #tpu.memory_space<vmem>>, vector<32x128xf32>
    %cst_15 = arith.constant dense<0.000000e+00> : vector<2x128xf32>
    %15 = tpu.matmul %9, %14, %cst_15 {dimension_numbers = #tpu.dot_dimension_numbers<[1], [0], [0], [1], [0, 0, 1, 1], [], []>} : vector<2x32xf32>, vector<32x128xf32>, vector<2x128xf32> -> vector<2x128xf32>
    %16 = arith.addf %13, %15 : vector<2x128xf32>
    %17 = vector.extract_strided_slice %16 {offsets = [0, 0], sizes = [2, 96], strides = [1, 1]} : vector<2x128xf32> to vector<2x96xf32>
    %18 = arith.negf %17 : vector<2x96xf32>
    %19 = math.exp %18 : vector<2x96xf32>
    %cst_16 = arith.constant 1.000000e+00 : f32
    %20 = vector.broadcast %cst_16 : f32 to vector<2x96xf32>
    %21 = arith.addf %20, %19 : vector<2x96xf32>
    %22 = arith.divf %20, %21 : vector<2x96xf32>
    %23 = vector.extract_strided_slice %22 {offsets = [0, 0], sizes = [2, 32], strides = [1, 1]} : vector<2x96xf32> to vector<2x32xf32>
    %24 = vector.extract_strided_slice %22 {offsets = [0, 32], sizes = [2, 32], strides = [1, 1]} : vector<2x96xf32> to vector<2x32xf32>
    %25 = vector.extract_strided_slice %22 {offsets = [0, 64], sizes = [2, 32], strides = [1, 1]} : vector<2x96xf32> to vector<2x32xf32>
    %26 = vector.extract_strided_slice %16 {offsets = [0, 96], sizes = [2, 32], strides = [1, 1]} : vector<2x128xf32> to vector<2x32xf32>
    %27 = math.tanh %26 : vector<2x32xf32>
    %28 = arith.mulf %24, %10 : vector<2x32xf32>
    %29 = arith.mulf %23, %27 : vector<2x32xf32>
    %30 = arith.addf %28, %29 : vector<2x32xf32>
    %31 = math.tanh %30 : vector<2x32xf32>
    %32 = arith.mulf %25, %31 : vector<2x32xf32>
    %c1_i32 = arith.constant 1 : i32
    %c0_17 = arith.constant 0 : index
    %33 = arith.index_cast %c1_i32 : i32 to index
    %c0_18 = arith.constant 0 : index
    %34 = vector.load %arg10[%c0_17, %33, %c0_18] : memref<2x8x128xf32, #tpu.memory_space<vmem>>, vector<2x1x128xf32>
    %35 = vector.shape_cast %34 : vector<2x1x128xf32> to vector<2x128xf32>
    %c0_19 = arith.constant 0 : index
    %c0_20 = arith.constant 0 : index
    %36 = vector.load %arg2[%c0_19, %c0_20] : memref<32x128xf32, #tpu.memory_space<vmem>>, vector<32x128xf32>
    %cst_21 = arith.constant dense<0.000000e+00> : vector<2x128xf32>
    %37 = tpu.matmul %32, %36, %cst_21 {dimension_numbers = #tpu.dot_dimension_numbers<[1], [0], [0], [1], [0, 0, 1, 1], [], []>} : vector<2x32xf32>, vector<32x128xf32>, vector<2x128xf32> -> vector<2x128xf32>
    %38 = arith.addf %35, %37 : vector<2x128xf32>
    %39 = vector.extract_strided_slice %38 {offsets = [0, 0], sizes = [2, 96], strides = [1, 1]} : vector<2x128xf32> to vector<2x96xf32>
    %40 = arith.negf %39 : vector<2x96xf32>
    %41 = math.exp %40 : vector<2x96xf32>
    %cst_22 = arith.constant 1.000000e+00 : f32
    %42 = vector.broadcast %cst_22 : f32 to vector<2x96xf32>
    %43 = arith.addf %42, %41 : vector<2x96xf32>
    %44 = arith.divf %42, %43 : vector<2x96xf32>
    %45 = vector.extract_strided_slice %44 {offsets = [0, 0], sizes = [2, 32], strides = [1, 1]} : vector<2x96xf32> to vector<2x32xf32>
    %46 = vector.extract_strided_slice %44 {offsets = [0, 32], sizes = [2, 32], strides = [1, 1]} : vector<2x96xf32> to vector<2x32xf32>
    %47 = vector.extract_strided_slice %44 {offsets = [0, 64], sizes = [2, 32], strides = [1, 1]} : vector<2x96xf32> to vector<2x32xf32>
    %48 = vector.extract_strided_slice %38 {offsets = [0, 96], sizes = [2, 32], strides = [1, 1]} : vector<2x128xf32> to vector<2x32xf32>
    %49 = math.tanh %48 : vector<2x32xf32>
    %50 = arith.mulf %46, %30 : vector<2x32xf32>
    %51 = arith.mulf %45, %49 : vector<2x32xf32>
    %52 = arith.addf %50, %51 : vector<2x32xf32>
    %53 = math.tanh %52 : vector<2x32xf32>
    %54 = arith.mulf %47, %53 : vector<2x32xf32>
    %c2_i32 = arith.constant 2 : i32
    %c0_23 = arith.constant 0 : index
    %55 = arith.index_cast %c2_i32 : i32 to index
    %c0_24 = arith.constant 0 : index
    %56 = vector.load %arg10[%c0_23, %55, %c0_24] : memref<2x8x128xf32, #tpu.memory_space<vmem>>, vector<2x1x128xf32>
    %57 = vector.shape_cast %56 : vector<2x1x128xf32> to vector<2x128xf32>
    %c0_25 = arith.constant 0 : index
    %c0_26 = arith.constant 0 : index
    %58 = vector.load %arg2[%c0_25, %c0_26] : memref<32x128xf32, #tpu.memory_space<vmem>>, vector<32x128xf32>
    %cst_27 = arith.constant dense<0.000000e+00> : vector<2x128xf32>
    %59 = tpu.matmul %54, %58, %cst_27 {dimension_numbers = #tpu.dot_dimension_numbers<[1], [0], [0], [1], [0, 0, 1, 1], [], []>} : vector<2x32xf32>, vector<32x128xf32>, vector<2x128xf32> -> vector<2x128xf32>
    %60 = arith.addf %57, %59 : vector<2x128xf32>
    %61 = vector.extract_strided_slice %60 {offsets = [0, 0], sizes = [2, 96], strides = [1, 1]} : vector<2x128xf32> to vector<2x96xf32>
    %62 = arith.negf %61 : vector<2x96xf32>
    %63 = math.exp %62 : vector<2x96xf32>
    %cst_28 = arith.constant 1.000000e+00 : f32
    %64 = vector.broadcast %cst_28 : f32 to vector<2x96xf32>
    %65 = arith.addf %64, %63 : vector<2x96xf32>
    %66 = arith.divf %64, %65 : vector<2x96xf32>
    %67 = vector.extract_strided_slice %66 {offsets = [0, 0], sizes = [2, 32], strides = [1, 1]} : vector<2x96xf32> to vector<2x32xf32>
    %68 = vector.extract_strided_slice %66 {offsets = [0, 32], sizes = [2, 32], strides = [1, 1]} : vector<2x96xf32> to vector<2x32xf32>
    %69 = vector.extract_strided_slice %66 {offsets = [0, 64], sizes = [2, 32], strides = [1, 1]} : vector<2x96xf32> to vector<2x32xf32>
    %70 = vector.extract_strided_slice %60 {offsets = [0, 96], sizes = [2, 32], strides = [1, 1]} : vector<2x128xf32> to vector<2x32xf32>
    %71 = math.tanh %70 : vector<2x32xf32>
    %72 = arith.mulf %68, %52 : vector<2x32xf32>
    %73 = arith.mulf %67, %71 : vector<2x32xf32>
    %74 = arith.addf %72, %73 : vector<2x32xf32>
    %75 = math.tanh %74 : vector<2x32xf32>
    %76 = arith.mulf %69, %75 : vector<2x32xf32>
    %c3_i32 = arith.constant 3 : i32
    %c0_29 = arith.constant 0 : index
    %77 = arith.index_cast %c3_i32 : i32 to index
    %c0_30 = arith.constant 0 : index
    %78 = vector.load %arg10[%c0_29, %77, %c0_30] : memref<2x8x128xf32, #tpu.memory_space<vmem>>, vector<2x1x128xf32>
    %79 = vector.shape_cast %78 : vector<2x1x128xf32> to vector<2x128xf32>
    %c0_31 = arith.constant 0 : index
    %c0_32 = arith.constant 0 : index
    %80 = vector.load %arg2[%c0_31, %c0_32] : memref<32x128xf32, #tpu.memory_space<vmem>>, vector<32x128xf32>
    %cst_33 = arith.constant dense<0.000000e+00> : vector<2x128xf32>
    %81 = tpu.matmul %76, %80, %cst_33 {dimension_numbers = #tpu.dot_dimension_numbers<[1], [0], [0], [1], [0, 0, 1, 1], [], []>} : vector<2x32xf32>, vector<32x128xf32>, vector<2x128xf32> -> vector<2x128xf32>
    %82 = arith.addf %79, %81 : vector<2x128xf32>
    %83 = vector.extract_strided_slice %82 {offsets = [0, 0], sizes = [2, 96], strides = [1, 1]} : vector<2x128xf32> to vector<2x96xf32>
    %84 = arith.negf %83 : vector<2x96xf32>
    %85 = math.exp %84 : vector<2x96xf32>
    %cst_34 = arith.constant 1.000000e+00 : f32
    %86 = vector.broadcast %cst_34 : f32 to vector<2x96xf32>
    %87 = arith.addf %86, %85 : vector<2x96xf32>
    %88 = arith.divf %86, %87 : vector<2x96xf32>
    %89 = vector.extract_strided_slice %88 {offsets = [0, 0], sizes = [2, 32], strides = [1, 1]} : vector<2x96xf32> to vector<2x32xf32>
    %90 = vector.extract_strided_slice %88 {offsets = [0, 32], sizes = [2, 32], strides = [1, 1]} : vector<2x96xf32> to vector<2x32xf32>
    %91 = vector.extract_strided_slice %88 {offsets = [0, 64], sizes = [2, 32], strides = [1, 1]} : vector<2x96xf32> to vector<2x32xf32>
    %92 = vector.extract_strided_slice %82 {offsets = [0, 96], sizes = [2, 32], strides = [1, 1]} : vector<2x128xf32> to vector<2x32xf32>
    %93 = math.tanh %92 : vector<2x32xf32>
    %94 = arith.mulf %90, %74 : vector<2x32xf32>
    %95 = arith.mulf %89, %93 : vector<2x32xf32>
    %96 = arith.addf %94, %95 : vector<2x32xf32>
    %97 = math.tanh %96 : vector<2x32xf32>
    %98 = arith.mulf %91, %97 : vector<2x32xf32>
    %c4_i32 = arith.constant 4 : i32
    %c0_35 = arith.constant 0 : index
    %99 = arith.index_cast %c4_i32 : i32 to index
    %c0_36 = arith.constant 0 : index
    %100 = vector.load %arg10[%c0_35, %99, %c0_36] : memref<2x8x128xf32, #tpu.memory_space<vmem>>, vector<2x1x128xf32>
    %101 = vector.shape_cast %100 : vector<2x1x128xf32> to vector<2x128xf32>
    %c0_37 = arith.constant 0 : index
    %c0_38 = arith.constant 0 : index
    %102 = vector.load %arg2[%c0_37, %c0_38] : memref<32x128xf32, #tpu.memory_space<vmem>>, vector<32x128xf32>
    %cst_39 = arith.constant dense<0.000000e+00> : vector<2x128xf32>
    %103 = tpu.matmul %98, %102, %cst_39 {dimension_numbers = #tpu.dot_dimension_numbers<[1], [0], [0], [1], [0, 0, 1, 1], [], []>} : vector<2x32xf32>, vector<32x128xf32>, vector<2x128xf32> -> vector<2x128xf32>
    %104 = arith.addf %101, %103 : vector<2x128xf32>
    %105 = vector.extract_strided_slice %104 {offsets = [0, 0], sizes = [2, 96], strides = [1, 1]} : vector<2x128xf32> to vector<2x96xf32>
    %106 = arith.negf %105 : vector<2x96xf32>
    %107 = math.exp %106 : vector<2x96xf32>
    %cst_40 = arith.constant 1.000000e+00 : f32
    %108 = vector.broadcast %cst_40 : f32 to vector<2x96xf32>
    %109 = arith.addf %108, %107 : vector<2x96xf32>
    %110 = arith.divf %108, %109 : vector<2x96xf32>
    %111 = vector.extract_strided_slice %110 {offsets = [0, 0], sizes = [2, 32], strides = [1, 1]} : vector<2x96xf32> to vector<2x32xf32>
    %112 = vector.extract_strided_slice %110 {offsets = [0, 32], sizes = [2, 32], strides = [1, 1]} : vector<2x96xf32> to vector<2x32xf32>
    %113 = vector.extract_strided_slice %110 {offsets = [0, 64], sizes = [2, 32], strides = [1, 1]} : vector<2x96xf32> to vector<2x32xf32>
    %114 = vector.extract_strided_slice %104 {offsets = [0, 96], sizes = [2, 32], strides = [1, 1]} : vector<2x128xf32> to vector<2x32xf32>
    %115 = math.tanh %114 : vector<2x32xf32>
    %116 = arith.mulf %112, %96 : vector<2x32xf32>
    %117 = arith.mulf %111, %115 : vector<2x32xf32>
    %118 = arith.addf %116, %117 : vector<2x32xf32>
    %119 = math.tanh %118 : vector<2x32xf32>
    %120 = arith.mulf %113, %119 : vector<2x32xf32>
    %c5_i32 = arith.constant 5 : i32
    %c0_41 = arith.constant 0 : index
    %121 = arith.index_cast %c5_i32 : i32 to index
    %c0_42 = arith.constant 0 : index
    %122 = vector.load %arg10[%c0_41, %121, %c0_42] : memref<2x8x128xf32, #tpu.memory_space<vmem>>, vector<2x1x128xf32>
    %123 = vector.shape_cast %122 : vector<2x1x128xf32> to vector<2x128xf32>
    %c0_43 = arith.constant 0 : index
    %c0_44 = arith.constant 0 : index
    %124 = vector.load %arg2[%c0_43, %c0_44] : memref<32x128xf32, #tpu.memory_space<vmem>>, vector<32x128xf32>
    %cst_45 = arith.constant dense<0.000000e+00> : vector<2x128xf32>
    %125 = tpu.matmul %120, %124, %cst_45 {dimension_numbers = #tpu.dot_dimension_numbers<[1], [0], [0], [1], [0, 0, 1, 1], [], []>} : vector<2x32xf32>, vector<32x128xf32>, vector<2x128xf32> -> vector<2x128xf32>
    %126 = arith.addf %123, %125 : vector<2x128xf32>
    %127 = vector.extract_strided_slice %126 {offsets = [0, 0], sizes = [2, 96], strides = [1, 1]} : vector<2x128xf32> to vector<2x96xf32>
    %128 = arith.negf %127 : vector<2x96xf32>
    %129 = math.exp %128 : vector<2x96xf32>
    %cst_46 = arith.constant 1.000000e+00 : f32
    %130 = vector.broadcast %cst_46 : f32 to vector<2x96xf32>
    %131 = arith.addf %130, %129 : vector<2x96xf32>
    %132 = arith.divf %130, %131 : vector<2x96xf32>
    %133 = vector.extract_strided_slice %132 {offsets = [0, 0], sizes = [2, 32], strides = [1, 1]} : vector<2x96xf32> to vector<2x32xf32>
    %134 = vector.extract_strided_slice %132 {offsets = [0, 32], sizes = [2, 32], strides = [1, 1]} : vector<2x96xf32> to vector<2x32xf32>
    %135 = vector.extract_strided_slice %132 {offsets = [0, 64], sizes = [2, 32], strides = [1, 1]} : vector<2x96xf32> to vector<2x32xf32>
    %136 = vector.extract_strided_slice %126 {offsets = [0, 96], sizes = [2, 32], strides = [1, 1]} : vector<2x128xf32> to vector<2x32xf32>
    %137 = math.tanh %136 : vector<2x32xf32>
    %138 = arith.mulf %134, %118 : vector<2x32xf32>
    %139 = arith.mulf %133, %137 : vector<2x32xf32>
    %140 = arith.addf %138, %139 : vector<2x32xf32>
    %141 = math.tanh %140 : vector<2x32xf32>
    %142 = arith.mulf %135, %141 : vector<2x32xf32>
    %c6_i32 = arith.constant 6 : i32
    %c0_47 = arith.constant 0 : index
    %143 = arith.index_cast %c6_i32 : i32 to index
    %c0_48 = arith.constant 0 : index
    %144 = vector.load %arg10[%c0_47, %143, %c0_48] : memref<2x8x128xf32, #tpu.memory_space<vmem>>, vector<2x1x128xf32>
    %145 = vector.shape_cast %144 : vector<2x1x128xf32> to vector<2x128xf32>
    %c0_49 = arith.constant 0 : index
    %c0_50 = arith.constant 0 : index
    %146 = vector.load %arg2[%c0_49, %c0_50] : memref<32x128xf32, #tpu.memory_space<vmem>>, vector<32x128xf32>
    %cst_51 = arith.constant dense<0.000000e+00> : vector<2x128xf32>
    %147 = tpu.matmul %142, %146, %cst_51 {dimension_numbers = #tpu.dot_dimension_numbers<[1], [0], [0], [1], [0, 0, 1, 1], [], []>} : vector<2x32xf32>, vector<32x128xf32>, vector<2x128xf32> -> vector<2x128xf32>
    %148 = arith.addf %145, %147 : vector<2x128xf32>
    %149 = vector.extract_strided_slice %148 {offsets = [0, 0], sizes = [2, 96], strides = [1, 1]} : vector<2x128xf32> to vector<2x96xf32>
    %150 = arith.negf %149 : vector<2x96xf32>
    %151 = math.exp %150 : vector<2x96xf32>
    %cst_52 = arith.constant 1.000000e+00 : f32
    %152 = vector.broadcast %cst_52 : f32 to vector<2x96xf32>
    %153 = arith.addf %152, %151 : vector<2x96xf32>
    %154 = arith.divf %152, %153 : vector<2x96xf32>
    %155 = vector.extract_strided_slice %154 {offsets = [0, 0], sizes = [2, 32], strides = [1, 1]} : vector<2x96xf32> to vector<2x32xf32>
    %156 = vector.extract_strided_slice %154 {offsets = [0, 32], sizes = [2, 32], strides = [1, 1]} : vector<2x96xf32> to vector<2x32xf32>
    %157 = vector.extract_strided_slice %154 {offsets = [0, 64], sizes = [2, 32], strides = [1, 1]} : vector<2x96xf32> to vector<2x32xf32>
    %158 = vector.extract_strided_slice %148 {offsets = [0, 96], sizes = [2, 32], strides = [1, 1]} : vector<2x128xf32> to vector<2x32xf32>
    %159 = math.tanh %158 : vector<2x32xf32>
    %160 = arith.mulf %156, %140 : vector<2x32xf32>
    %161 = arith.mulf %155, %159 : vector<2x32xf32>
    %162 = arith.addf %160, %161 : vector<2x32xf32>
    %163 = math.tanh %162 : vector<2x32xf32>
    %164 = arith.mulf %157, %163 : vector<2x32xf32>
    %c7_i32 = arith.constant 7 : i32
    %c0_53 = arith.constant 0 : index
    %165 = arith.index_cast %c7_i32 : i32 to index
    %c0_54 = arith.constant 0 : index
    %166 = vector.load %arg10[%c0_53, %165, %c0_54] : memref<2x8x128xf32, #tpu.memory_space<vmem>>, vector<2x1x128xf32>
    %167 = vector.shape_cast %166 : vector<2x1x128xf32> to vector<2x128xf32>
    %c0_55 = arith.constant 0 : index
    %c0_56 = arith.constant 0 : index
    %168 = vector.load %arg2[%c0_55, %c0_56] : memref<32x128xf32, #tpu.memory_space<vmem>>, vector<32x128xf32>
    %cst_57 = arith.constant dense<0.000000e+00> : vector<2x128xf32>
    %169 = tpu.matmul %164, %168, %cst_57 {dimension_numbers = #tpu.dot_dimension_numbers<[1], [0], [0], [1], [0, 0, 1, 1], [], []>} : vector<2x32xf32>, vector<32x128xf32>, vector<2x128xf32> -> vector<2x128xf32>
    %170 = arith.addf %167, %169 : vector<2x128xf32>
    %171 = vector.extract_strided_slice %170 {offsets = [0, 0], sizes = [2, 96], strides = [1, 1]} : vector<2x128xf32> to vector<2x96xf32>
    %172 = arith.negf %171 : vector<2x96xf32>
    %173 = math.exp %172 : vector<2x96xf32>
    %cst_58 = arith.constant 1.000000e+00 : f32
    %174 = vector.broadcast %cst_58 : f32 to vector<2x96xf32>
    %175 = arith.addf %174, %173 : vector<2x96xf32>
    %176 = arith.divf %174, %175 : vector<2x96xf32>
    %177 = vector.extract_strided_slice %176 {offsets = [0, 0], sizes = [2, 32], strides = [1, 1]} : vector<2x96xf32> to vector<2x32xf32>
    %178 = vector.extract_strided_slice %176 {offsets = [0, 32], sizes = [2, 32], strides = [1, 1]} : vector<2x96xf32> to vector<2x32xf32>
    %179 = vector.extract_strided_slice %176 {offsets = [0, 64], sizes = [2, 32], strides = [1, 1]} : vector<2x96xf32> to vector<2x32xf32>
    %180 = vector.extract_strided_slice %170 {offsets = [0, 96], sizes = [2, 32], strides = [1, 1]} : vector<2x128xf32> to vector<2x32xf32>
    %181 = math.tanh %180 : vector<2x32xf32>
    %182 = arith.mulf %178, %162 : vector<2x32xf32>
    %183 = arith.mulf %177, %181 : vector<2x32xf32>
    %184 = arith.addf %182, %183 : vector<2x32xf32>
    %185 = math.tanh %184 : vector<2x32xf32>
    %186 = arith.mulf %179, %185 : vector<2x32xf32>
    %c8_i32 = arith.constant 8 : i32
    %187 = vector.extract_strided_slice %0 {offsets = [0, 7, 0], sizes = [2, 1, 32], strides = [1, 1, 1]} : vector<2x8x32xf32> to vector<2x1x32xf32>
    %188 = vector.shape_cast %187 : vector<2x1x32xf32> to vector<2x32xf32>
    %c0_59 = arith.constant 0 : index
    %c0_60 = arith.constant 0 : index
    %189 = vector.load %arg4[%c0_59, %c0_60] : memref<32x128xf32, #tpu.memory_space<vmem>>, vector<32x128xf32>
    %cst_61 = arith.constant dense<0.000000e+00> : vector<2x128xf32>
    %190 = tpu.matmul %188, %189, %cst_61 {dimension_numbers = #tpu.dot_dimension_numbers<[1], [0], [0], [1], [0, 0, 1, 1], [], []>} : vector<2x32xf32>, vector<32x128xf32>, vector<2x128xf32> -> vector<2x128xf32>
    %c0_62 = arith.constant 0 : index
    %c0_63 = arith.constant 0 : index
    %191 = vector.load %arg5[%c0_62, %c0_63] : memref<32x128xf32, #tpu.memory_space<vmem>>, vector<32x128xf32>
    %cst_64 = arith.constant dense<0.000000e+00> : vector<2x128xf32>
    %192 = tpu.matmul %186, %191, %cst_64 {dimension_numbers = #tpu.dot_dimension_numbers<[1], [0], [0], [1], [0, 0, 1, 1], [], []>} : vector<2x32xf32>, vector<32x128xf32>, vector<2x128xf32> -> vector<2x128xf32>
    %193 = arith.addf %190, %192 : vector<2x128xf32>
    %c0_65 = arith.constant 0 : index
    %c0_66 = arith.constant 0 : index
    %194 = vector.load %arg6[%c0_65, %c0_66] : memref<1x128xf32, #tpu.memory_space<vmem>>, vector<1x128xf32>
    %195 = vector.broadcast %194 : vector<1x128xf32> to vector<2x128xf32>
    %196 = arith.addf %193, %195 : vector<2x128xf32>
    %197 = vector.extract_strided_slice %196 {offsets = [0, 0], sizes = [2, 96], strides = [1, 1]} : vector<2x128xf32> to vector<2x96xf32>
    %198 = arith.negf %197 : vector<2x96xf32>
    %199 = math.exp %198 : vector<2x96xf32>
    %cst_67 = arith.constant 1.000000e+00 : f32
    %200 = vector.broadcast %cst_67 : f32 to vector<2x96xf32>
    %201 = arith.addf %200, %199 : vector<2x96xf32>
    %202 = arith.divf %200, %201 : vector<2x96xf32>
    %203 = vector.extract_strided_slice %202 {offsets = [0, 0], sizes = [2, 32], strides = [1, 1]} : vector<2x96xf32> to vector<2x32xf32>
    %204 = vector.extract_strided_slice %202 {offsets = [0, 32], sizes = [2, 32], strides = [1, 1]} : vector<2x96xf32> to vector<2x32xf32>
    %205 = vector.extract_strided_slice %202 {offsets = [0, 64], sizes = [2, 32], strides = [1, 1]} : vector<2x96xf32> to vector<2x32xf32>
    %206 = vector.extract_strided_slice %196 {offsets = [0, 96], sizes = [2, 32], strides = [1, 1]} : vector<2x128xf32> to vector<2x32xf32>
    %207 = math.tanh %206 : vector<2x32xf32>
    %208 = arith.mulf %204, %184 : vector<2x32xf32>
    %209 = arith.mulf %203, %207 : vector<2x32xf32>
    %210 = arith.addf %208, %209 : vector<2x32xf32>
    %211 = math.tanh %210 : vector<2x32xf32>
    %212 = arith.mulf %205, %211 : vector<2x32xf32>
    %c0_68 = arith.constant 0 : index
    %c0_69 = arith.constant 0 : index
    %213 = vector.load %arg7[%c0_68, %c0_69] : memref<32x16xf32, #tpu.memory_space<vmem>>, vector<32x16xf32>
    %cst_70 = arith.constant dense<0.000000e+00> : vector<2x16xf32>
    %214 = tpu.matmul %212, %213, %cst_70 {dimension_numbers = #tpu.dot_dimension_numbers<[1], [0], [0], [1], [0, 0, 1, 1], [], []>} : vector<2x32xf32>, vector<32x16xf32>, vector<2x16xf32> -> vector<2x16xf32>
    %c0_71 = arith.constant 0 : index
    %c0_72 = arith.constant 0 : index
    %215 = vector.load %arg8[%c0_71, %c0_72] : memref<1x16xf32, #tpu.memory_space<vmem>>, vector<1x16xf32>
    %216 = vector.broadcast %215 : vector<1x16xf32> to vector<2x16xf32>
    %217 = arith.addf %214, %216 : vector<2x16xf32>
    %c0_73 = arith.constant 0 : index
    %c0_74 = arith.constant 0 : index
    %218 = vector.load %arg9[%c0_73, %c0_74] : memref<2x16xf32, #tpu.memory_space<vmem>>, vector<2x16xf32>
    tpu.vector_store %arg9[%c0_73, %c0_74], %217 {strides = array<i32>} : memref<2x16xf32, #tpu.memory_space<vmem>>, vector<2x16xf32>,
    return
  }
}

</mosaic_0001>

<llo_original>
// kernel: tpu_custom_call.1
$region0: #{tpu_custom_call.1}
  #allocation0 [shape = 'u32[]', space=smem, size = 0x4, offset = 0x4, fixed_abs, tag = 'smem constant byte address 0x4 - core index']
  #allocation1 [shape = 'u32[144,128]{1,0:T(1,128)}', space=vmem, size = 0x12000, scoped, tag = 'internal scratch']
  #allocation2 [shape = 'f32[2,8,128]{2,1,0:T(8,128)}', space=vmem, size = 0x2000, scoped, tag = 'scratch operand']
  %s0 = inlined_call_operand.hbm [shape: f32[2,8,32], index: 0, kind: input, shape index: {}]
  %s1 = inlined_call_operand.vmem [shape: f32[32,128], index: 1, kind: input, shape index: {}]
  %s2 = inlined_call_operand.hbm [shape: f32[32,128], index: 2, kind: input, shape index: {}]
  %s3 = inlined_call_operand.vmem [shape: f32[1,128], index: 3, kind: input, shape index: {}]
  %s4 = inlined_call_operand.hbm [shape: f32[32,128], index: 4, kind: input, shape index: {}]
  %s5 = inlined_call_operand.vmem [shape: f32[32,128], index: 5, kind: input, shape index: {}]
  %s6 = inlined_call_operand.vmem [shape: f32[1,128], index: 6, kind: input, shape index: {}]
  %s7 = inlined_call_operand.vmem [shape: f32[32,16], index: 7, kind: input, shape index: {}]
  %s8 = inlined_call_operand.vmem [shape: f32[1,16], index: 8, kind: input, shape index: {}]
  %s9 = inlined_call_operand.hbm [shape: f32[2,16], index: 9, kind: output, shape index: {}]
  %s10 = sld [smem:[#allocation0]]
  $region58: #{tpu_custom_call.1} parent=0
    _
  %s12 = ssub.s32 1, %s10
  %s13 = scalar_select 0, %s12, %s10
  $region1: #{tpu_custom_call.1} parent=0
    #allocation3 [shape = 'u8[8192]{0}', space=vmem, size = 0x2000, scoped, tag = 'input window, operand 0, single buffered']
    #allocation4 [shape = 's32[1]{0}', space=sflag, size = 0x4, scoped, tag = 'scoped memory for tpu_custom_call.1']
    #allocation5 [shape = 's32[1]{0}', space=sflag, size = 0x4, scoped, tag = 'scoped memory for tpu_custom_call.1']
    #allocation6 [shape = 'u8[16384]{0}', space=vmem, size = 0x4000, scoped, tag = 'input window, operand 2, single buffered']
    #allocation7 [shape = 's32[1]{0}', space=sflag, size = 0x4, scoped, tag = 'scoped memory for tpu_custom_call.1']
    #allocation8 [shape = 'u8[16384]{0}', space=vmem, size = 0x4000, scoped, tag = 'input window, operand 4, single buffered']
    #allocation9 [shape = 'u8[1024]{0}', space=vmem, size = 0x400, scoped, tag = 'output window, operand 0, single buffered']
    %14 = vsyncpa [#allocation4], 0
    %15 = vsyncpa [#allocation7], 0
    %16 = vsyncpa [#allocation5], 0
    // Predicated region
    $region2: #{tpu_custom_call.1} parent=1 // pred_check
      _
    $region3: #{tpu_custom_call.1} parent=1 // pred_check_branch
      %18 = sbr.rel (0) target = $region5
    $region4: #{tpu_custom_call.1} parent=1 // pred_region
      %s20 = ssub.s32 256, 256
      %21 = vsyncadd [#allocation4], %s20
      %s22 = sshll.u32 [#allocation3], 4
      %s23 = int_to_ptr.vmem [resolvable:$true] %s22
      %28 = dma.hbm_to_vmem [thread:$0]  %s0, 256, %s23, [#allocation4], 128, 128, 8
    $region5: #{tpu_custom_call.1} parent=1 // pred_fallthru
      _
    // Predicated region
    $region6: #{tpu_custom_call.1} parent=1 // pred_check
      _
    $region7: #{tpu_custom_call.1} parent=1 // pred_check_branch
      %30 = sbr.rel (0) target = $region9
    $region8: #{tpu_custom_call.1} parent=1 // pred_region
      _
    $region9: #{tpu_custom_call.1} parent=1 // pred_fallthru
      _
    // Predicated region
    $region10: #{tpu_custom_call.1} parent=1 // pred_check
      _
    $region11: #{tpu_custom_call.1} parent=1 // pred_check_branch
      %32 = sbr.rel (0) target = $region13
    $region12: #{tpu_custom_call.1} parent=1 // pred_region
      %s34 = ssub.s32 512, 512
      %35 = vsyncadd [#allocation7], %s34
      %s36 = sshll.u32 [#allocation6], 4
      %s37 = int_to_ptr.vmem [resolvable:$true] %s36
      %42 = dma.hbm_to_vmem [thread:$0]  %s2, 512, %s37, [#allocation7], 128, 128, 8
    $region13: #{tpu_custom_call.1} parent=1 // pred_fallthru
      _
    // Predicated region
    $region14: #{tpu_custom_call.1} parent=1 // pred_check
      _
    $region15: #{tpu_custom_call.1} parent=1 // pred_check_branch
      %44 = sbr.rel (0) target = $region17
    $region16: #{tpu_custom_call.1} parent=1 // pred_region
      _
    $region17: #{tpu_custom_call.1} parent=1 // pred_fallthru
      _
    // Predicated region
    $region18: #{tpu_custom_call.1} parent=1 // pred_check
      _
    $region19: #{tpu_custom_call.1} parent=1 // pred_check_branch
      %46 = sbr.rel (0) target = $region21
    $region20: #{tpu_custom_call.1} parent=1 // pred_region
      %s48 = ssub.s32 512, 512
      %49 = vsyncadd [#allocation7], %s48
      %s50 = sshll.u32 [#allocation8], 4
      %s51 = int_to_ptr.vmem [resolvable:$true] %s50
      %56 = dma.hbm_to_vmem [thread:$0]  %s4, 512, %s51, [#allocation7], 128, 128, 8
    $region21: #{tpu_custom_call.1} parent=1 // pred_fallthru
      _
    // Predicated region
    $region22: #{tpu_custom_call.1} parent=1 // pred_check
      _
    $region23: #{tpu_custom_call.1} parent=1 // pred_check_branch
      %58 = sbr.rel (0) target = $region25
    $region24: #{tpu_custom_call.1} parent=1 // pred_region
      _
    $region25: #{tpu_custom_call.1} parent=1 // pred_fallthru
      _
    // Predicated region
    $region26: #{tpu_custom_call.1} parent=1 // pred_check
      _
    $region27: #{tpu_custom_call.1} parent=1 // pred_check_branch
      %60 = sbr.rel (0) target = $region29
    $region28: #{tpu_custom_call.1} parent=1 // pred_region
      _
    $region29: #{tpu_custom_call.1} parent=1 // pred_fallthru
      _
    // Predicated region
    $region30: #{tpu_custom_call.1} parent=1 // pred_check
      _
    $region31: #{tpu_custom_call.1} parent=1 // pred_check_branch
      %62 = sbr.rel (0) target = $region33
    $region32: #{tpu_custom_call.1} parent=1 // pred_region
      _
    $region33: #{tpu_custom_call.1} parent=1 // pred_fallthru
      _
    // Predicated region
    $region34: #{tpu_custom_call.1} parent=1 // pred_check
      _
    $region35: #{tpu_custom_call.1} parent=1 // pred_check_branch
      %64 = sbr.rel (0) target = $region37
    $region36: #{tpu_custom_call.1} parent=1 // pred_region
      _
    $region37: #{tpu_custom_call.1} parent=1 // pred_fallthru
      _
    // Predicated region
    $region38: #{tpu_custom_call.1} parent=1 // pred_check
      _
    $region39: #{tpu_custom_call.1} parent=1 // pred_check_branch
      %66 = sbr.rel (0) target = $region41
    $region40: #{tpu_custom_call.1} parent=1 // pred_region
      %67 = dma.done [#allocation4], 256
    $region41: #{tpu_custom_call.1} parent=1 // pred_fallthru
      _
    // Predicated region
    $region42: #{tpu_custom_call.1} parent=1 // pred_check
      _
    $region43: #{tpu_custom_call.1} parent=1 // pred_check_branch
      %69 = sbr.rel (0) target = $region45
    $region44: #{tpu_custom_call.1} parent=1 // pred_region
      %70 = dma.done [#allocation7], 512
    $region45: #{tpu_custom_call.1} parent=1 // pred_fallthru
      _
    // Predicated region
    $region46: #{tpu_custom_call.1} parent=1 // pred_check
      _
    $region47: #{tpu_custom_call.1} parent=1 // pred_check_branch
      %72 = sbr.rel (0) target = $region49
    $region48: #{tpu_custom_call.1} parent=1 // pred_region
      %73 = dma.done [#allocation7], 512
    $region49: #{tpu_custom_call.1} parent=1 // pred_fallthru
      _
    %v74 = vld [vmem:[#allocation3] sm:$0xff]
    %v75 = vld [vmem:[#allocation3 + $0x8] sm:$0xff]
    %v76 = vld [vmem:[%s1] sm:$0xff]
    %v77 = vld [vmem:[%s1 + $0x8] sm:$0xff]
    %v78 = vld [vmem:[%s1 + $0x10] sm:$0xff]
    %v79 = vld [vmem:[%s1 + $0x18] sm:$0xff]
    %v80 = vld [vmem:[%s3] sm:$0x1]
    %v82 = vlaneseq
    %v83 = vshrl.u32 %v82, 7
    %v84 = vsub.s32 0, %v83
    %v85 = vrot.slane %v80, %v84
    %vm87 = vcmask 261120
    %v89 = vsel %vm87, %v74, 0
    %v92 = vsel %vm87, %v75, 0
    %94 = vmatprep.subr.mxu0 0.0
    %95 = vmatpush1.msra.mxu0 %v76
    %96 = vmatprep.subr.mxu0 0.0
    %97 = vmatpush1.msra.mxu0 %v77
    %98 = vmatprep.subr.mxu0 0.0
    %99 = vmatpush1.msra.mxu0 %v78
    %100 = vmatprep.subr.mxu0 0.0
    %101 = vmatpush1.msra.mxu0 %v79
    %102 = vmatprep.subr.mxu0 0.0
    %103 = vmatpush1.msra.mxu0 0.0
    %104 = vmatprep.subr.mxu0 0.0
    %105 = vmatpush1.msra.mxu0 0.0
    %106 = vmatprep.subr.mxu0 0.0
    %107 = vmatpush1.msra.mxu0 0.0
    %108 = vmatprep.subr.mxu0 0.0
    %109 = vmatpush1.msra.mxu0 0.0
    %110 = vmatprep.subr.mxu0 0.0
    %111 = vmatpush1.msra.mxu0 0.0
    %112 = vmatprep.subr.mxu0 0.0
    %113 = vmatpush1.msra.mxu0 0.0
    %114 = vmatprep.subr.mxu0 0.0
    %115 = vmatpush1.msra.mxu0 0.0
    %116 = vmatprep.subr.mxu0 0.0
    %117 = vmatpush1.msra.mxu0 0.0
    %118 = vmatprep.subr.mxu0 0.0
    %119 = vmatpush1.msra.mxu0 0.0
    %120 = vmatprep.subr.mxu0 0.0
    %121 = vmatpush1.msra.mxu0 0.0
    %122 = vmatprep.subr.mxu0 0.0
    %123 = vmatpush1.msra.mxu0 0.0
    %124 = vmatprep.subr.mxu0 0.0
    %125 = vmatpush1.msra.mxu0 0.0
    %126 = vmatprep.subr.mxu0 0.0
    %127 = vmatpush1.msra.mxu0 0.0
    %128 = vmatprep.subr.mxu0 0.0
    %129 = vmatpush1.msra.mxu0 0.0
    %130 = vmatprep.subr.mxu0 0.0
    %131 = vmatpush1.msra.mxu0 0.0
    %132 = vmatprep.subr.mxu0 0.0
    %133 = vmatpush1.msra.mxu0 0.0
    %134 = vmatprep.subr.mxu0 0.0
    %135 = vmatpush1.msra.mxu0 0.0
    %136 = vmatprep.subr.mxu0 0.0
    %137 = vmatpush1.msra.mxu0 0.0
    %138 = vmatprep.subr.mxu0 0.0
    %139 = vmatpush1.msra.mxu0 0.0
    %140 = vmatprep.subr.mxu0 0.0
    %141 = vmatpush1.msra.mxu0 0.0
    %142 = vmatprep.subr.mxu0 0.0
    %143 = vmatpush1.msra.mxu0 0.0
    %144 = vmatprep.subr.mxu0 0.0
    %145 = vmatpush1.msra.mxu0 0.0
    %146 = vmatprep.subr.mxu0 0.0
    %147 = vmatpush1.msra.mxu0 0.0
    %148 = vmatprep.subr.mxu0 0.0
    %149 = vmatpush1.msra.mxu0 0.0
    %150 = vmatprep.subr.mxu0 0.0
    %151 = vmatpush1.msra.mxu0 0.0
    %152 = vmatprep.subr.mxu0 0.0
    %153 = vmatpush1.msra.mxu0 0.0
    %154 = vmatprep.subr.mxu0 0.0
    %155 = vmatpush1.msra.mxu0 0.0
    %156 = vmatprep.subr.mxu0 0.0
    %157 = vmatpush1.msra.mxu0 0.0
    %158 = vmatprep.mubr.f32.mxu0 0.0
    %159 = vmatmul.mubr.f32.gmra.mrb[0].mxu0 %v89
    %v160 = vpop.f32.mrb[0].mxu0
    %v161 = vadd.f32 %v85, %v160
    %v162 = vpop.f32.mrb[0].mxu0
    %163 = vmatprep.mubr.f32.mxu0 0.0
    %164 = vmatmul.mubr.f32.gmra.mrb[0].mxu0 %v92
    %v165 = vpop.f32.mrb[0].mxu0
    %v166 = vadd.f32 %v85, %v165
    %v167 = vpop.f32.mrb[0].mxu0
    %168 = vdwg.mxu0
    %169 = vst [vmem:[#allocation2] sm:$0xff] %v161
    %170 = vst [vmem:[#allocation2 + $0x8] sm:$0xff] %v166
    %v171 = vld [vmem:[#allocation2] sm:$0x1]
    %v172 = vld [vmem:[#allocation2 + $0x8] sm:$0x1]
    %v173 = vld [vmem:[#allocation6] sm:$0xff]
    %v174 = vld [vmem:[#allocation6 + $0x8] sm:$0xff]
    %v175 = vld [vmem:[#allocation6 + $0x10] sm:$0xff]
    %v176 = vld [vmem:[#allocation6 + $0x18] sm:$0xff]
    %v178 = vsel %vm87, 0.0, 0
    %180 = vmatprep.subr.mxu0 0.0
    %181 = vmatpush1.msra.mxu0 %v173
    %182 = vmatprep.subr.mxu0 0.0
    %183 = vmatpush1.msra.mxu0 %v174
    %184 = vmatprep.subr.mxu0 0.0
    %185 = vmatpush1.msra.mxu0 %v175
    %186 = vmatprep.subr.mxu0 0.0
    %187 = vmatpush1.msra.mxu0 %v176
    %188 = vmatprep.subr.mxu0 0.0
    %189 = vmatpush1.msra.mxu0 0.0
    %190 = vmatprep.subr.mxu0 0.0
    %191 = vmatpush1.msra.mxu0 0.0
    %192 = vmatprep.subr.mxu0 0.0
    %193 = vmatpush1.msra.mxu0 0.0
    %194 = vmatprep.subr.mxu0 0.0
    %195 = vmatpush1.msra.mxu0 0.0
    %196 = vmatprep.subr.mxu0 0.0
    %197 = vmatpush1.msra.mxu0 0.0
    %198 = vmatprep.subr.mxu0 0.0
    %199 = vmatpush1.msra.mxu0 0.0
    %200 = vmatprep.subr.mxu0 0.0
    %201 = vmatpush1.msra.mxu0 0.0
    %202 = vmatprep.subr.mxu0 0.0
    %203 = vmatpush1.msra.mxu0 0.0
    %204 = vmatprep.subr.mxu0 0.0
    %205 = vmatpush1.msra.mxu0 0.0
    %206 = vmatprep.subr.mxu0 0.0
    %207 = vmatpush1.msra.mxu0 0.0
    %208 = vmatprep.subr.mxu0 0.0
    %209 = vmatpush1.msra.mxu0 0.0
    %210 = vmatprep.subr.mxu0 0.0
    %211 = vmatpush1.msra.mxu0 0.0
    %212 = vmatprep.subr.mxu0 0.0
    %213 = vmatpush1.msra.mxu0 0.0
    %214 = vmatprep.subr.mxu0 0.0
    %215 = vmatpush1.msra.mxu0 0.0
    %216 = vmatprep.subr.mxu0 0.0
    %217 = vmatpush1.msra.mxu0 0.0
    %218 = vmatprep.subr.mxu0 0.0
    %219 = vmatpush1.msra.mxu0 0.0
    %220 = vmatprep.subr.mxu0 0.0
    %221 = vmatpush1.msra.mxu0 0.0
    %222 = vmatprep.subr.mxu0 0.0
    %223 = vmatpush1.msra.mxu0 0.0
    %224 = vmatprep.subr.mxu0 0.0
    %225 = vmatpush1.msra.mxu0 0.0
    %226 = vmatprep.subr.mxu0 0.0
    %227 = vmatpush1.msra.mxu0 0.0
    %228 = vmatprep.subr.mxu0 0.0
    %229 = vmatpush1.msra.mxu0 0.0
    %230 = vmatprep.subr.mxu0 0.0
    %231 = vmatpush1.msra.mxu0 0.0
    %232 = vmatprep.subr.mxu0 0.0
    %233 = vmatpush1.msra.mxu0 0.0
    %234 = vmatprep.subr.mxu0 0.0
    %235 = vmatpush1.msra.mxu0 0.0
    %236 = vmatprep.subr.mxu0 0.0
    %237 = vmatpush1.msra.mxu0 0.0
    %238 = vmatprep.subr.mxu0 0.0
    %239 = vmatpush1.msra.mxu0 0.0
    %240 = vmatprep.subr.mxu0 0.0
    %241 = vmatpush1.msra.mxu0 0.0
    %242 = vmatprep.subr.mxu0 0.0
    %243 = vmatpush1.msra.mxu0 0.0
    %244 = vmatprep.mubr.f32.mxu0 0.0
    %245 = vmatmul.mubr.f32.gmra.mrb[0].mxu0 %v178
    %v246 = vpop.f32.mrb[0].mxu0
    %v247 = vadd.f32 0.0, %v246
    %v248 = vpop.f32.mrb[0].mxu0
    %249 = vdwg.mxu0
    %v251 = vrot.slane %v247, 1
    %v254 = vadd.f32 %v171, %v247
    %v255 = vadd.f32 %v172, %v251
    %v256 = vxor.u32 %v254, 2147483648
    %v257 = vxor.u32 %v255, 2147483648
    %v258 = vmul.f32 %v256, 1.442695
    %v259 = vpow.pop %v258
    %v260 = vmul.f32 %v257, 1.442695
    %v261 = vpow.pop %v260
    %v262 = vadd.f32 %v259, 1.0
    %v263 = vadd.f32 %v261, 1.0
    %v264 = vrcp.pop %v262
    %v265 = vmul.f32 1.0, %v264
    %v266 = vrcp.pop %v263
    %v267 = vmul.f32 1.0, %v266
    %v268 = vtanh.pop %v254
    %v269 = vtanh.pop %v255
    %v270 = vmul.f32 %v265, 0.0
    %v271 = vmul.f32 %v267, 0.0
    %274 = vrot.lane.b32.xlu0 %v268, 32
    %v275 = vpop.permute.xlu0 %274
    %276 = vrot.lane.b32.xlu0 %v269, 32
    %v277 = vpop.permute.xlu0 %276
    %v280 = vmul.f32 %v265, %v275
    %v281 = vmul.f32 %v267, %v277
    %284 = vrot.lane.b32.xlu0 %v280, 32
    %v285 = vpop.permute.xlu0 %284
    %286 = vrot.lane.b32.xlu0 %v281, 32
    %v287 = vpop.permute.xlu0 %286
    %v290 = vadd.f32 %v270, %v285
    %v291 = vadd.f32 %v271, %v287
    %v292 = vtanh.pop %v290
    %v293 = vtanh.pop %v291
    %296 = vrot.lane.b32.xlu0 %v292, 32
    %v297 = vpop.permute.xlu0 %296
    %298 = vrot.lane.b32.xlu0 %v293, 32
    %v299 = vpop.permute.xlu0 %298
    %v302 = vmul.f32 %v265, %v297
    %v303 = vmul.f32 %v267, %v299
    %v304 = vld [vmem:[#allocation2 + $0x1] sm:$0x1]
    %v305 = vld [vmem:[#allocation2 + $0x9] sm:$0x1]
    %v308 = vrot.slane %v303, 7
    %vm309 = vcmask 1041409
    %v310 = vsel %vm309, %v308, %v302
    %311 = vrot.lane.b32.xlu0 %v310, 64
    %v312 = vpop.permute.xlu0 %311
    %v313 = vsel %vm87, %v312, 0
    %315 = vmatprep.subr.mxu0 0.0
    %316 = vmatpush1.msra.mxu0 %v173
    %317 = vmatprep.subr.mxu0 0.0
    %318 = vmatpush1.msra.mxu0 %v174
    %319 = vmatprep.subr.mxu0 0.0
    %320 = vmatpush1.msra.mxu0 %v175
    %321 = vmatprep.subr.mxu0 0.0
    %322 = vmatpush1.msra.mxu0 %v176
    %323 = vmatprep.subr.mxu0 0.0
    %324 = vmatpush1.msra.mxu0 0.0
    %325 = vmatprep.subr.mxu0 0.0
    %326 = vmatpush1.msra.mxu0 0.0
    %327 = vmatprep.subr.mxu0 0.0
    %328 = vmatpush1.msra.mxu0 0.0
    %329 = vmatprep.subr.mxu0 0.0
    %330 = vmatpush1.msra.mxu0 0.0
    %331 = vmatprep.subr.mxu0 0.0
    %332 = vmatpush1.msra.mxu0 0.0
    %333 = vmatprep.subr.mxu0 0.0
    %334 = vmatpush1.msra.mxu0 0.0
    %335 = vmatprep.subr.mxu0 0.0
    %336 = vmatpush1.msra.mxu0 0.0
    %337 = vmatprep.subr.mxu0 0.0
    %338 = vmatpush1.msra.mxu0 0.0
    %339 = vmatprep.subr.mxu0 0.0
    %340 = vmatpush1.msra.mxu0 0.0
    %341 = vmatprep.subr.mxu0 0.0
    %342 = vmatpush1.msra.mxu0 0.0
    %343 = vmatprep.subr.mxu0 0.0
    %344 = vmatpush1.msra.mxu0 0.0
    %345 = vmatprep.subr.mxu0 0.0
    %346 = vmatpush1.msra.mxu0 0.0
    %347 = vmatprep.subr.mxu0 0.0
    %348 = vmatpush1.msra.mxu0 0.0
    %349 = vmatprep.subr.mxu0 0.0
    %350 = vmatpush1.msra.mxu0 0.0
    %351 = vmatprep.subr.mxu0 0.0
    %352 = vmatpush1.msra.mxu0 0.0
    %353 = vmatprep.subr.mxu0 0.0
    %354 = vmatpush1.msra.mxu0 0.0
    %355 = vmatprep.subr.mxu0 0.0
    %356 = vmatpush1.msra.mxu0 0.0
    %357 = vmatprep.subr.mxu0 0.0
    %358 = vmatpush1.msra.mxu0 0.0
    %359 = vmatprep.subr.mxu0 0.0
    %360 = vmatpush1.msra.mxu0 0.0
    %361 = vmatprep.subr.mxu0 0.0
    %362 = vmatpush1.msra.mxu0 0.0
    %363 = vmatprep.subr.mxu0 0.0
    %364 = vmatpush1.msra.mxu0 0.0
    %365 = vmatprep.subr.mxu0 0.0
    %366 = vmatpush1.msra.mxu0 0.0
    %367 = vmatprep.subr.mxu0 0.0
    %368 = vmatpush1.msra.mxu0 0.0
    %369 = vmatprep.subr.mxu0 0.0
    %370 = vmatpush1.msra.mxu0 0.0
    %371 = vmatprep.subr.mxu0 0.0
    %372 = vmatpush1.msra.mxu0 0.0
    %373 = vmatprep.subr.mxu0 0.0
    %374 = vmatpush1.msra.mxu0 0.0
    %375 = vmatprep.subr.mxu0 0.0
    %376 = vmatpush1.msra.mxu0 0.0
    %377 = vmatprep.subr.mxu0 0.0
    %378 = vmatpush1.msra.mxu0 0.0
    %379 = vmatprep.mubr.f32.mxu0 0.0
    %380 = vmatmul.mubr.f32.gmra.mrb[0].mxu0 %v313
    %v381 = vpop.f32.mrb[0].mxu0
    %v382 = vadd.f32 0.0, %v381
    %v383 = vpop.f32.mrb[0].mxu0
    %384 = vdwg.mxu0
    %v386 = vrot.slane %v382, 1
    %v389 = vadd.f32 %v304, %v382
    %v390 = vadd.f32 %v305, %v386
    %v391 = vxor.u32 %v389, 2147483648
    %v392 = vxor.u32 %v390, 2147483648
    %v393 = vmul.f32 %v391, 1.442695
    %v394 = vpow.pop %v393
    %v395 = vmul.f32 %v392, 1.442695
    %v396 = vpow.pop %v395
    %v397 = vadd.f32 %v394, 1.0
    %v398 = vadd.f32 %v396, 1.0
    %v399 = vrcp.pop %v397
    %v400 = vmul.f32 1.0, %v399
    %v401 = vrcp.pop %v398
    %v402 = vmul.f32 1.0, %v401
    %v403 = vtanh.pop %v389
    %v404 = vtanh.pop %v390
    %v405 = vmul.f32 %v400, %v290
    %v406 = vmul.f32 %v402, %v291
    %409 = vrot.lane.b32.xlu0 %v403, 32
    %v410 = vpop.permute.xlu0 %409
    %411 = vrot.lane.b32.xlu0 %v404, 32
    %v412 = vpop.permute.xlu0 %411
    %v415 = vmul.f32 %v400, %v410
    %v416 = vmul.f32 %v402, %v412
    %419 = vrot.lane.b32.xlu0 %v415, 32
    %v420 = vpop.permute.xlu0 %419
    %421 = vrot.lane.b32.xlu0 %v416, 32
    %v422 = vpop.permute.xlu0 %421
    %v425 = vadd.f32 %v405, %v420
    %v426 = vadd.f32 %v406, %v422
    %v427 = vtanh.pop %v425
    %v428 = vtanh.pop %v426
    %431 = vrot.lane.b32.xlu0 %v427, 32
    %v432 = vpop.permute.xlu0 %431
    %433 = vrot.lane.b32.xlu0 %v428, 32
    %v434 = vpop.permute.xlu0 %433
    %v437 = vmul.f32 %v400, %v432
    %v438 = vmul.f32 %v402, %v434
    %v439 = vld [vmem:[#allocation2 + $0x2] sm:$0x1]
    %v440 = vld [vmem:[#allocation2 + $0xa] sm:$0x1]
    %v443 = vrot.slane %v438, 7
    %v444 = vsel %vm309, %v443, %v437
    %445 = vrot.lane.b32.xlu0 %v444, 64
    %v446 = vpop.permute.xlu0 %445
    %v447 = vsel %vm87, %v446, 0
    %449 = vmatprep.subr.mxu0 0.0
    %450 = vmatpush1.msra.mxu0 %v173
    %451 = vmatprep.subr.mxu0 0.0
    %452 = vmatpush1.msra.mxu0 %v174
    %453 = vmatprep.subr.mxu0 0.0
    %454 = vmatpush1.msra.mxu0 %v175
    %455 = vmatprep.subr.mxu0 0.0
    %456 = vmatpush1.msra.mxu0 %v176
    %457 = vmatprep.subr.mxu0 0.0
    %458 = vmatpush1.msra.mxu0 0.0
    %459 = vmatprep.subr.mxu0 0.0
    %460 = vmatpush1.msra.mxu0 0.0
    %461 = vmatprep.subr.mxu0 0.0
    %462 = vmatpush1.msra.mxu0 0.0
    %463 = vmatprep.subr.mxu0 0.0
    %464 = vmatpush1.msra.mxu0 0.0
    %465 = vmatprep.subr.mxu0 0.0
    %466 = vmatpush1.msra.mxu0 0.0
    %467 = vmatprep.subr.mxu0 0.0
    %468 = vmatpush1.msra.mxu0 0.0
    %469 = vmatprep.subr.mxu0 0.0
    %470 = vmatpush1.msra.mxu0 0.0
    %471 = vmatprep.subr.mxu0 0.0
    %472 = vmatpush1.msra.mxu0 0.0
    %473 = vmatprep.subr.mxu0 0.0
    %474 = vmatpush1.msra.mxu0 0.0
    %475 = vmatprep.subr.mxu0 0.0
    %476 = vmatpush1.msra.mxu0 0.0
    %477 = vmatprep.subr.mxu0 0.0
    %478 = vmatpush1.msra.mxu0 0.0
    %479 = vmatprep.subr.mxu0 0.0
    %480 = vmatpush1.msra.mxu0 0.0
    %481 = vmatprep.subr.mxu0 0.0
    %482 = vmatpush1.msra.mxu0 0.0
    %483 = vmatprep.subr.mxu0 0.0
    %484 = vmatpush1.msra.mxu0 0.0
    %485 = vmatprep.subr.mxu0 0.0
    %486 = vmatpush1.msra.mxu0 0.0
    %487 = vmatprep.subr.mxu0 0.0
    %488 = vmatpush1.msra.mxu0 0.0
    %489 = vmatprep.subr.mxu0 0.0
    %490 = vmatpush1.msra.mxu0 0.0
    %491 = vmatprep.subr.mxu0 0.0
    %492 = vmatpush1.msra.mxu0 0.0
    %493 = vmatprep.subr.mxu0 0.0
    %494 = vmatpush1.msra.mxu0 0.0
    %495 = vmatprep.subr.mxu0 0.0
    %496 = vmatpush1.msra.mxu0 0.0
    %497 = vmatprep.subr.mxu0 0.0
    %498 = vmatpush1.msra.mxu0 0.0
    %499 = vmatprep.subr.mxu0 0.0
    %500 = vmatpush1.msra.mxu0 0.0
    %501 = vmatprep.subr.mxu0 0.0
    %502 = vmatpush1.msra.mxu0 0.0
    %503 = vmatprep.subr.mxu0 0.0
    %504 = vmatpush1.msra.mxu0 0.0
    %505 = vmatprep.subr.mxu0 0.0
    %506 = vmatpush1.msra.mxu0 0.0
    %507 = vmatprep.subr.mxu0 0.0
    %508 = vmatpush1.msra.mxu0 0.0
    %509 = vmatprep.subr.mxu0 0.0
    %510 = vmatpush1.msra.mxu0 0.0
    %511 = vmatprep.subr.mxu0 0.0
    %512 = vmatpush1.msra.mxu0 0.0
    %513 = vmatprep.mubr.f32.mxu0 0.0
    %514 = vmatmul.mubr.f32.gmra.mrb[0].mxu0 %v447
    %v515 = vpop.f32.mrb[0].mxu0
    %v516 = vadd.f32 0.0, %v515
    %v517 = vpop.f32.mrb[0].mxu0
    %518 = vdwg.mxu0
    %v520 = vrot.slane %v516, 1
    %v523 = vadd.f32 %v439, %v516
    %v524 = vadd.f32 %v440, %v520
    %v525 = vxor.u32 %v523, 2147483648
    %v526 = vxor.u32 %v524, 2147483648
    %v527 = vmul.f32 %v525, 1.442695
    %v528 = vpow.pop %v527
    %v529 = vmul.f32 %v526, 1.442695
    %v530 = vpow.pop %v529
    %v531 = vadd.f32 %v528, 1.0
    %v532 = vadd.f32 %v530, 1.0
    %v533 = vrcp.pop %v531
    %v534 = vmul.f32 1.0, %v533
    %v535 = vrcp.pop %v532
    %v536 = vmul.f32 1.0, %v535
    %v537 = vtanh.pop %v523
    %v538 = vtanh.pop %v524
    %v539 = vmul.f32 %v534, %v425
    %v540 = vmul.f32 %v536, %v426
    %543 = vrot.lane.b32.xlu0 %v537, 32
    %v544 = vpop.permute.xlu0 %543
    %545 = vrot.lane.b32.xlu0 %v538, 32
    %v546 = vpop.permute.xlu0 %545
    %v549 = vmul.f32 %v534, %v544
    %v550 = vmul.f32 %v536, %v546
    %553 = vrot.lane.b32.xlu0 %v549, 32
    %v554 = vpop.permute.xlu0 %553
    %555 = vrot.lane.b32.xlu0 %v550, 32
    %v556 = vpop.permute.xlu0 %555
    %v559 = vadd.f32 %v539, %v554
    %v560 = vadd.f32 %v540, %v556
    %v561 = vtanh.pop %v559
    %v562 = vtanh.pop %v560
    %565 = vrot.lane.b32.xlu0 %v561, 32
    %v566 = vpop.permute.xlu0 %565
    %567 = vrot.lane.b32.xlu0 %v562, 32
    %v568 = vpop.permute.xlu0 %567
    %v571 = vmul.f32 %v534, %v566
    %v572 = vmul.f32 %v536, %v568
    %v573 = vld [vmem:[#allocation2 + $0x3] sm:$0x1]
    %v574 = vld [vmem:[#allocation2 + $0xb] sm:$0x1]
    %v577 = vrot.slane %v572, 7
    %v578 = vsel %vm309, %v577, %v571
    %579 = vrot.lane.b32.xlu0 %v578, 64
    %v580 = vpop.permute.xlu0 %579
    %v581 = vsel %vm87, %v580, 0
    %583 = vmatprep.subr.mxu0 0.0
    %584 = vmatpush1.msra.mxu0 %v173
    %585 = vmatprep.subr.mxu0 0.0
    %586 = vmatpush1.msra.mxu0 %v174
    %587 = vmatprep.subr.mxu0 0.0
    %588 = vmatpush1.msra.mxu0 %v175
    %589 = vmatprep.subr.mxu0 0.0
    %590 = vmatpush1.msra.mxu0 %v176
    %591 = vmatprep.subr.mxu0 0.0
    %592 = vmatpush1.msra.mxu0 0.0
    %593 = vmatprep.subr.mxu0 0.0
    %594 = vmatpush1.msra.mxu0 0.0
    %595 = vmatprep.subr.mxu0 0.0
    %596 = vmatpush1.msra.mxu0 0.0
    %597 = vmatprep.subr.mxu0 0.0
    %598 = vmatpush1.msra.mxu0 0.0
    %599 = vmatprep.subr.mxu0 0.0
    %600 = vmatpush1.msra.mxu0 0.0
    %601 = vmatprep.subr.mxu0 0.0
    %602 = vmatpush1.msra.mxu0 0.0
    %603 = vmatprep.subr.mxu0 0.0
    %604 = vmatpush1.msra.mxu0 0.0
    %605 = vmatprep.subr.mxu0 0.0
    %606 = vmatpush1.msra.mxu0 0.0
    %607 = vmatprep.subr.mxu0 0.0
    %608 = vmatpush1.msra.mxu0 0.0
    %609 = vmatprep.subr.mxu0 0.0
    %610 = vmatpush1.msra.mxu0 0.0
    %611 = vmatprep.subr.mxu0 0.0
    %612 = vmatpush1.msra.mxu0 0.0
    %613 = vmatprep.subr.mxu0 0.0
    %614 = vmatpush1.msra.mxu0 0.0
    %615 = vmatprep.subr.mxu0 0.0
    %616 = vmatpush1.msra.mxu0 0.0
    %617 = vmatprep.subr.mxu0 0.0
    %618 = vmatpush1.msra.mxu0 0.0
    %619 = vmatprep.subr.mxu0 0.0
    %620 = vmatpush1.msra.mxu0 0.0
    %621 = vmatprep.subr.mxu0 0.0
    %622 = vmatpush1.msra.mxu0 0.0
    %623 = vmatprep.subr.mxu0 0.0
    %624 = vmatpush1.msra.mxu0 0.0
    %625 = vmatprep.subr.mxu0 0.0
    %626 = vmatpush1.msra.mxu0 0.0
    %627 = vmatprep.subr.mxu0 0.0
    %628 = vmatpush1.msra.mxu0 0.0
    %629 = vmatprep.subr.mxu0 0.0
    %630 = vmatpush1.msra.mxu0 0.0
    %631 = vmatprep.subr.mxu0 0.0
    %632 = vmatpush1.msra.mxu0 0.0
    %633 = vmatprep.subr.mxu0 0.0
    %634 = vmatpush1.msra.mxu0 0.0
    %635 = vmatprep.subr.mxu0 0.0
    %636 = vmatpush1.msra.mxu0 0.0
    %637 = vmatprep.subr.mxu0 0.0
    %638 = vmatpush1.msra.mxu0 0.0
    %639 = vmatprep.subr.mxu0 0.0
    %640 = vmatpush1.msra.mxu0 0.0
    %641 = vmatprep.subr.mxu0 0.0
    %642 = vmatpush1.msra.mxu0 0.0
    %643 = vmatprep.subr.mxu0 0.0
    %644 = vmatpush1.msra.mxu0 0.0
    %645 = vmatprep.subr.mxu0 0.0
    %646 = vmatpush1.msra.mxu0 0.0
    %647 = vmatprep.mubr.f32.mxu0 0.0
    %648 = vmatmul.mubr.f32.gmra.mrb[0].mxu0 %v581
    %v649 = vpop.f32.mrb[0].mxu0
    %v650 = vadd.f32 0.0, %v649
    %v651 = vpop.f32.mrb[0].mxu0
    %652 = vdwg.mxu0
    %v654 = vrot.slane %v650, 1
    %v657 = vadd.f32 %v573, %v650
    %v658 = vadd.f32 %v574, %v654
    %v659 = vxor.u32 %v657, 2147483648
    %v660 = vxor.u32 %v658, 2147483648
    %v661 = vmul.f32 %v659, 1.442695
    %v662 = vpow.pop %v661
    %v663 = vmul.f32 %v660, 1.442695
    %v664 = vpow.pop %v663
    %v665 = vadd.f32 %v662, 1.0
    %v666 = vadd.f32 %v664, 1.0
    %v667 = vrcp.pop %v665
    %v668 = vmul.f32 1.0, %v667
    %v669 = vrcp.pop %v666
    %v670 = vmul.f32 1.0, %v669
    %v671 = vtanh.pop %v657
    %v672 = vtanh.pop %v658
    %v673 = vmul.f32 %v668, %v559
    %v674 = vmul.f32 %v670, %v560
    %677 = vrot.lane.b32.xlu0 %v671, 32
    %v678 = vpop.permute.xlu0 %677
    %679 = vrot.lane.b32.xlu0 %v672, 32
    %v680 = vpop.permute.xlu0 %679
    %v683 = vmul.f32 %v668, %v678
    %v684 = vmul.f32 %v670, %v680
    %687 = vrot.lane.b32.xlu0 %v683, 32
    %v688 = vpop.permute.xlu0 %687
    %689 = vrot.lane.b32.xlu0 %v684, 32
    %v690 = vpop.permute.xlu0 %689
    %v693 = vadd.f32 %v673, %v688
    %v694 = vadd.f32 %v674, %v690
    %v695 = vtanh.pop %v693
    %v696 = vtanh.pop %v694
    %699 = vrot.lane.b32.xlu0 %v695, 32
    %v700 = vpop.permute.xlu0 %699
    %701 = vrot.lane.b32.xlu0 %v696, 32
    %v702 = vpop.permute.xlu0 %701
    %v705 = vmul.f32 %v668, %v700
    %v706 = vmul.f32 %v670, %v702
    %v707 = vld [vmem:[#allocation2 + $0x4] sm:$0x1]
    %v708 = vld [vmem:[#allocation2 + $0xc] sm:$0x1]
    %v711 = vrot.slane %v706, 7
    %v712 = vsel %vm309, %v711, %v705
    %713 = vrot.lane.b32.xlu0 %v712, 64
    %v714 = vpop.permute.xlu0 %713
    %v715 = vsel %vm87, %v714, 0
    %717 = vmatprep.subr.mxu0 0.0
    %718 = vmatpush1.msra.mxu0 %v173
    %719 = vmatprep.subr.mxu0 0.0
    %720 = vmatpush1.msra.mxu0 %v174
    %721 = vmatprep.subr.mxu0 0.0
    %722 = vmatpush1.msra.mxu0 %v175
    %723 = vmatprep.subr.mxu0 0.0
    %724 = vmatpush1.msra.mxu0 %v176
    %725 = vmatprep.subr.mxu0 0.0
    %726 = vmatpush1.msra.mxu0 0.0
    %727 = vmatprep.subr.mxu0 0.0
    %728 = vmatpush1.msra.mxu0 0.0
    %729 = vmatprep.subr.mxu0 0.0
    %730 = vmatpush1.msra.mxu0 0.0
    %731 = vmatprep.subr.mxu0 0.0
    %732 = vmatpush1.msra.mxu0 0.0
    %733 = vmatprep.subr.mxu0 0.0
    %734 = vmatpush1.msra.mxu0 0.0
    %735 = vmatprep.subr.mxu0 0.0
    %736 = vmatpush1.msra.mxu0 0.0
    %737 = vmatprep.subr.mxu0 0.0
    %738 = vmatpush1.msra.mxu0 0.0
    %739 = vmatprep.subr.mxu0 0.0
    %740 = vmatpush1.msra.mxu0 0.0
    %741 = vmatprep.subr.mxu0 0.0
    %742 = vmatpush1.msra.mxu0 0.0
    %743 = vmatprep.subr.mxu0 0.0
    %744 = vmatpush1.msra.mxu0 0.0
    %745 = vmatprep.subr.mxu0 0.0
    %746 = vmatpush1.msra.mxu0 0.0
    %747 = vmatprep.subr.mxu0 0.0
    %748 = vmatpush1.msra.mxu0 0.0
    %749 = vmatprep.subr.mxu0 0.0
    %750 = vmatpush1.msra.mxu0 0.0
    %751 = vmatprep.subr.mxu0 0.0
    %752 = vmatpush1.msra.mxu0 0.0
    %753 = vmatprep.subr.mxu0 0.0
    %754 = vmatpush1.msra.mxu0 0.0
    %755 = vmatprep.subr.mxu0 0.0
    %756 = vmatpush1.msra.mxu0 0.0
    %757 = vmatprep.subr.mxu0 0.0
    %758 = vmatpush1.msra.mxu0 0.0
    %759 = vmatprep.subr.mxu0 0.0
    %760 = vmatpush1.msra.mxu0 0.0
    %761 = vmatprep.subr.mxu0 0.0
    %762 = vmatpush1.msra.mxu0 0.0
    %763 = vmatprep.subr.mxu0 0.0
    %764 = vmatpush1.msra.mxu0 0.0
    %765 = vmatprep.subr.mxu0 0.0
    %766 = vmatpush1.msra.mxu0 0.0
    %767 = vmatprep.subr.mxu0 0.0
    %768 = vmatpush1.msra.mxu0 0.0
    %769 = vmatprep.subr.mxu0 0.0
    %770 = vmatpush1.msra.mxu0 0.0
    %771 = vmatprep.subr.mxu0 0.0
    %772 = vmatpush1.msra.mxu0 0.0
    %773 = vmatprep.subr.mxu0 0.0
    %774 = vmatpush1.msra.mxu0 0.0
    %775 = vmatprep.subr.mxu0 0.0
    %776 = vmatpush1.msra.mxu0 0.0
    %777 = vmatprep.subr.mxu0 0.0
    %778 = vmatpush1.msra.mxu0 0.0
    %779 = vmatprep.subr.mxu0 0.0
    %780 = vmatpush1.msra.mxu0 0.0
    %781 = vmatprep.mubr.f32.mxu0 0.0
    %782 = vmatmul.mubr.f32.gmra.mrb[0].mxu0 %v715
    %v783 = vpop.f32.mrb[0].mxu0
    %v784 = vadd.f32 0.0, %v783
    %v785 = vpop.f32.mrb[0].mxu0
    %786 = vdwg.mxu0
    %v788 = vrot.slane %v784, 1
    %v791 = vadd.f32 %v707, %v784
    %v792 = vadd.f32 %v708, %v788
    %v793 = vxor.u32 %v791, 2147483648
    %v794 = vxor.u32 %v792, 2147483648
    %v795 = vmul.f32 %v793, 1.442695
    %v796 = vpow.pop %v795
    %v797 = vmul.f32 %v794, 1.442695
    %v798 = vpow.pop %v797
    %v799 = vadd.f32 %v796, 1.0
    %v800 = vadd.f32 %v798, 1.0
    %v801 = vrcp.pop %v799
    %v802 = vmul.f32 1.0, %v801
    %v803 = vrcp.pop %v800
    %v804 = vmul.f32 1.0, %v803
    %v805 = vtanh.pop %v791
    %v806 = vtanh.pop %v792
    %v807 = vmul.f32 %v802, %v693
    %v808 = vmul.f32 %v804, %v694
    %811 = vrot.lane.b32.xlu0 %v805, 32
    %v812 = vpop.permute.xlu0 %811
    %813 = vrot.lane.b32.xlu0 %v806, 32
    %v814 = vpop.permute.xlu0 %813
    %v817 = vmul.f32 %v802, %v812
    %v818 = vmul.f32 %v804, %v814
    %821 = vrot.lane.b32.xlu0 %v817, 32
    %v822 = vpop.permute.xlu0 %821
    %823 = vrot.lane.b32.xlu0 %v818, 32
    %v824 = vpop.permute.xlu0 %823
    %v827 = vadd.f32 %v807, %v822
    %v828 = vadd.f32 %v808, %v824
    %v829 = vtanh.pop %v827
    %v830 = vtanh.pop %v828
    %833 = vrot.lane.b32.xlu0 %v829, 32
    %v834 = vpop.permute.xlu0 %833
    %835 = vrot.lane.b32.xlu0 %v830, 32
    %v836 = vpop.permute.xlu0 %835
    %v839 = vmul.f32 %v802, %v834
    %v840 = vmul.f32 %v804, %v836
    %v841 = vld [vmem:[#allocation2 + $0x5] sm:$0x1]
    %v842 = vld [vmem:[#allocation2 + $0xd] sm:$0x1]
    %v845 = vrot.slane %v840, 7
    %v846 = vsel %vm309, %v845, %v839
    %847 = vrot.lane.b32.xlu0 %v846, 64
    %v848 = vpop.permute.xlu0 %847
    %v849 = vsel %vm87, %v848, 0
    %851 = vmatprep.subr.mxu0 0.0
    %852 = vmatpush1.msra.mxu0 %v173
    %853 = vmatprep.subr.mxu0 0.0
    %854 = vmatpush1.msra.mxu0 %v174
    %855 = vmatprep.subr.mxu0 0.0
    %856 = vmatpush1.msra.mxu0 %v175
    %857 = vmatprep.subr.mxu0 0.0
    %858 = vmatpush1.msra.mxu0 %v176
    %859 = vmatprep.subr.mxu0 0.0
    %860 = vmatpush1.msra.mxu0 0.0
    %861 = vmatprep.subr.mxu0 0.0
    %862 = vmatpush1.msra.mxu0 0.0
    %863 = vmatprep.subr.mxu0 0.0
    %864 = vmatpush1.msra.mxu0 0.0
    %865 = vmatprep.subr.mxu0 0.0
    %866 = vmatpush1.msra.mxu0 0.0
    %867 = vmatprep.subr.mxu0 0.0
    %868 = vmatpush1.msra.mxu0 0.0
    %869 = vmatprep.subr.mxu0 0.0
    %870 = vmatpush1.msra.mxu0 0.0
    %871 = vmatprep.subr.mxu0 0.0
    %872 = vmatpush1.msra.mxu0 0.0
    %873 = vmatprep.subr.mxu0 0.0
    %874 = vmatpush1.msra.mxu0 0.0
    %875 = vmatprep.subr.mxu0 0.0
    %876 = vmatpush1.msra.mxu0 0.0
    %877 = vmatprep.subr.mxu0 0.0
    %878 = vmatpush1.msra.mxu0 0.0
    %879 = vmatprep.subr.mxu0 0.0
    %880 = vmatpush1.msra.mxu0 0.0
    %881 = vmatprep.subr.mxu0 0.0
    %882 = vmatpush1.msra.mxu0 0.0
    %883 = vmatprep.subr.mxu0 0.0
    %884 = vmatpush1.msra.mxu0 0.0
    %885 = vmatprep.subr.mxu0 0.0
    %886 = vmatpush1.msra.mxu0 0.0
    %887 = vmatprep.subr.mxu0 0.0
    %888 = vmatpush1.msra.mxu0 0.0
    %889 = vmatprep.subr.mxu0 0.0
    %890 = vmatpush1.msra.mxu0 0.0
    %891 = vmatprep.subr.mxu0 0.0
    %892 = vmatpush1.msra.mxu0 0.0
    %893 = vmatprep.subr.mxu0 0.0
    %894 = vmatpush1.msra.mxu0 0.0
    %895 = vmatprep.subr.mxu0 0.0
    %896 = vmatpush1.msra.mxu0 0.0
    %897 = vmatprep.subr.mxu0 0.0
    %898 = vmatpush1.msra.mxu0 0.0
    %899 = vmatprep.subr.mxu0 0.0
    %900 = vmatpush1.msra.mxu0 0.0
    %901 = vmatprep.subr.mxu0 0.0
    %902 = vmatpush1.msra.mxu0 0.0
    %903 = vmatprep.subr.mxu0 0.0
    %904 = vmatpush1.msra.mxu0 0.0
    %905 = vmatprep.subr.mxu0 0.0
    %906 = vmatpush1.msra.mxu0 0.0
    %907 = vmatprep.subr.mxu0 0.0
    %908 = vmatpush1.msra.mxu0 0.0
    %909 = vmatprep.subr.mxu0 0.0
    %910 = vmatpush1.msra.mxu0 0.0
    %911 = vmatprep.subr.mxu0 0.0
    %912 = vmatpush1.msra.mxu0 0.0
    %913 = vmatprep.subr.mxu0 0.0
    %914 = vmatpush1.msra.mxu0 0.0
    %915 = vmatprep.mubr.f32.mxu0 0.0
    %916 = vmatmul.mubr.f32.gmra.mrb[0].mxu0 %v849
    %v917 = vpop.f32.mrb[0].mxu0
    %v918 = vadd.f32 0.0, %v917
    %v919 = vpop.f32.mrb[0].mxu0
    %920 = vdwg.mxu0
    %v922 = vrot.slane %v918, 1
    %v925 = vadd.f32 %v841, %v918
    %v926 = vadd.f32 %v842, %v922
    %v927 = vxor.u32 %v925, 2147483648
    %v928 = vxor.u32 %v926, 2147483648
    %v929 = vmul.f32 %v927, 1.442695
    %v930 = vpow.pop %v929
    %v931 = vmul.f32 %v928, 1.442695
    %v932 = vpow.pop %v931
    %v933 = vadd.f32 %v930, 1.0
    %v934 = vadd.f32 %v932, 1.0
    %v935 = vrcp.pop %v933
    %v936 = vmul.f32 1.0, %v935
    %v937 = vrcp.pop %v934
    %v938 = vmul.f32 1.0, %v937
    %v939 = vtanh.pop %v925
    %v940 = vtanh.pop %v926
    %v941 = vmul.f32 %v936, %v827
    %v942 = vmul.f32 %v938, %v828
    %945 = vrot.lane.b32.xlu0 %v939, 32
    %v946 = vpop.permute.xlu0 %945
    %947 = vrot.lane.b32.xlu0 %v940, 32
    %v948 = vpop.permute.xlu0 %947
    %v951 = vmul.f32 %v936, %v946
    %v952 = vmul.f32 %v938, %v948
    %955 = vrot.lane.b32.xlu0 %v951, 32
    %v956 = vpop.permute.xlu0 %955
    %957 = vrot.lane.b32.xlu0 %v952, 32
    %v958 = vpop.permute.xlu0 %957
    %v961 = vadd.f32 %v941, %v956
    %v962 = vadd.f32 %v942, %v958
    %v963 = vtanh.pop %v961
    %v964 = vtanh.pop %v962
    %967 = vrot.lane.b32.xlu0 %v963, 32
    %v968 = vpop.permute.xlu0 %967
    %969 = vrot.lane.b32.xlu0 %v964, 32
    %v970 = vpop.permute.xlu0 %969
    %v973 = vmul.f32 %v936, %v968
    %v974 = vmul.f32 %v938, %v970
    %v975 = vld [vmem:[#allocation2 + $0x6] sm:$0x1]
    %v976 = vld [vmem:[#allocation2 + $0xe] sm:$0x1]
    %v979 = vrot.slane %v974, 7
    %v980 = vsel %vm309, %v979, %v973
    %981 = vrot.lane.b32.xlu0 %v980, 64
    %v982 = vpop.permute.xlu0 %981
    %v983 = vsel %vm87, %v982, 0
    %985 = vmatprep.subr.mxu0 0.0
    %986 = vmatpush1.msra.mxu0 %v173
    %987 = vmatprep.subr.mxu0 0.0
    %988 = vmatpush1.msra.mxu0 %v174
    %989 = vmatprep.subr.mxu0 0.0
    %990 = vmatpush1.msra.mxu0 %v175
    %991 = vmatprep.subr.mxu0 0.0
    %992 = vmatpush1.msra.mxu0 %v176
    %993 = vmatprep.subr.mxu0 0.0
    %994 = vmatpush1.msra.mxu0 0.0
    %995 = vmatprep.subr.mxu0 0.0
    %996 = vmatpush1.msra.mxu0 0.0
    %997 = vmatprep.subr.mxu0 0.0
    %998 = vmatpush1.msra.mxu0 0.0
    %999 = vmatprep.subr.mxu0 0.0
    %1000 = vmatpush1.msra.mxu0 0.0
    %1001 = vmatprep.subr.mxu0 0.0
    %1002 = vmatpush1.msra.mxu0 0.0
    %1003 = vmatprep.subr.mxu0 0.0
    %1004 = vmatpush1.msra.mxu0 0.0
    %1005 = vmatprep.subr.mxu0 0.0
    %1006 = vmatpush1.msra.mxu0 0.0
    %1007 = vmatprep.subr.mxu0 0.0
    %1008 = vmatpush1.msra.mxu0 0.0
    %1009 = vmatprep.subr.mxu0 0.0
    %1010 = vmatpush1.msra.mxu0 0.0
    %1011 = vmatprep.subr.mxu0 0.0
    %1012 = vmatpush1.msra.mxu0 0.0
    %1013 = vmatprep.subr.mxu0 0.0
    %1014 = vmatpush1.msra.mxu0 0.0
    %1015 = vmatprep.subr.mxu0 0.0
    %1016 = vmatpush1.msra.mxu0 0.0
    %1017 = vmatprep.subr.mxu0 0.0
    %1018 = vmatpush1.msra.mxu0 0.0
    %1019 = vmatprep.subr.mxu0 0.0
    %1020 = vmatpush1.msra.mxu0 0.0
    %1021 = vmatprep.subr.mxu0 0.0
    %1022 = vmatpush1.msra.mxu0 0.0
    %1023 = vmatprep.subr.mxu0 0.0
    %1024 = vmatpush1.msra.mxu0 0.0
    %1025 = vmatprep.subr.mxu0 0.0
    %1026 = vmatpush1.msra.mxu0 0.0
    %1027 = vmatprep.subr.mxu0 0.0
    %1028 = vmatpush1.msra.mxu0 0.0
    %1029 = vmatprep.subr.mxu0 0.0
    %1030 = vmatpush1.msra.mxu0 0.0
    %1031 = vmatprep.subr.mxu0 0.0
    %1032 = vmatpush1.msra.mxu0 0.0
    %1033 = vmatprep.subr.mxu0 0.0
    %1034 = vmatpush1.msra.mxu0 0.0
    %1035 = vmatprep.subr.mxu0 0.0
    %1036 = vmatpush1.msra.mxu0 0.0
    %1037 = vmatprep.subr.mxu0 0.0
    %1038 = vmatpush1.msra.mxu0 0.0
    %1039 = vmatprep.subr.mxu0 0.0
    %1040 = vmatpush1.msra.mxu0 0.0
    %1041 = vmatprep.subr.mxu0 0.0
    %1042 = vmatpush1.msra.mxu0 0.0
    %1043 = vmatprep.subr.mxu0 0.0
    %1044 = vmatpush1.msra.mxu0 0.0
    %1045 = vmatprep.subr.mxu0 0.0
    %1046 = vmatpush1.msra.mxu0 0.0
    %1047 = vmatprep.subr.mxu0 0.0
    %1048 = vmatpush1.msra.mxu0 0.0
    %1049 = vmatprep.mubr.f32.mxu0 0.0
    %1050 = vmatmul.mubr.f32.gmra.mrb[0].mxu0 %v983
    %v1051 = vpop.f32.mrb[0].mxu0
    %v1052 = vadd.f32 0.0, %v1051
    %v1053 = vpop.f32.mrb[0].mxu0
    %1054 = vdwg.mxu0
    %v1056 = vrot.slane %v1052, 1
    %v1059 = vadd.f32 %v975, %v1052
    %v1060 = vadd.f32 %v976, %v1056
    %v1061 = vxor.u32 %v1059, 2147483648
    %v1062 = vxor.u32 %v1060, 2147483648
    %v1063 = vmul.f32 %v1061, 1.442695
    %v1064 = vpow.pop %v1063
    %v1065 = vmul.f32 %v1062, 1.442695
    %v1066 = vpow.pop %v1065
    %v1067 = vadd.f32 %v1064, 1.0
    %v1068 = vadd.f32 %v1066, 1.0
    %v1069 = vrcp.pop %v1067
    %v1070 = vmul.f32 1.0, %v1069
    %v1071 = vrcp.pop %v1068
    %v1072 = vmul.f32 1.0, %v1071
    %v1073 = vtanh.pop %v1059
    %v1074 = vtanh.pop %v1060
    %v1075 = vmul.f32 %v1070, %v961
    %v1076 = vmul.f32 %v1072, %v962
    %1079 = vrot.lane.b32.xlu0 %v1073, 32
    %v1080 = vpop.permute.xlu0 %1079
    %1081 = vrot.lane.b32.xlu0 %v1074, 32
    %v1082 = vpop.permute.xlu0 %1081
    %v1085 = vmul.f32 %v1070, %v1080
    %v1086 = vmul.f32 %v1072, %v1082
    %1089 = vrot.lane.b32.xlu0 %v1085, 32
    %v1090 = vpop.permute.xlu0 %1089
    %1091 = vrot.lane.b32.xlu0 %v1086, 32
    %v1092 = vpop.permute.xlu0 %1091
    %v1095 = vadd.f32 %v1075, %v1090
    %v1096 = vadd.f32 %v1076, %v1092
    %v1097 = vtanh.pop %v1095
    %v1098 = vtanh.pop %v1096
    %1101 = vrot.lane.b32.xlu0 %v1097, 32
    %v1102 = vpop.permute.xlu0 %1101
    %1103 = vrot.lane.b32.xlu0 %v1098, 32
    %v1104 = vpop.permute.xlu0 %1103
    %v1107 = vmul.f32 %v1070, %v1102
    %v1108 = vmul.f32 %v1072, %v1104
    %v1109 = vld [vmem:[#allocation2 + $0x7] sm:$0x1]
    %v1110 = vld [vmem:[#allocation2 + $0xf] sm:$0x1]
    %v1113 = vrot.slane %v1108, 7
    %v1114 = vsel %vm309, %v1113, %v1107
    %1115 = vrot.lane.b32.xlu0 %v1114, 64
    %v1116 = vpop.permute.xlu0 %1115
    %v1117 = vsel %vm87, %v1116, 0
    %1119 = vmatprep.subr.mxu0 0.0
    %1120 = vmatpush1.msra.mxu0 %v173
    %1121 = vmatprep.subr.mxu0 0.0
    %1122 = vmatpush1.msra.mxu0 %v174
    %1123 = vmatprep.subr.mxu0 0.0
    %1124 = vmatpush1.msra.mxu0 %v175
    %1125 = vmatprep.subr.mxu0 0.0
    %1126 = vmatpush1.msra.mxu0 %v176
    %1127 = vmatprep.subr.mxu0 0.0
    %1128 = vmatpush1.msra.mxu0 0.0
    %1129 = vmatprep.subr.mxu0 0.0
    %1130 = vmatpush1.msra.mxu0 0.0
    %1131 = vmatprep.subr.mxu0 0.0
    %1132 = vmatpush1.msra.mxu0 0.0
    %1133 = vmatprep.subr.mxu0 0.0
    %1134 = vmatpush1.msra.mxu0 0.0
    %1135 = vmatprep.subr.mxu0 0.0
    %1136 = vmatpush1.msra.mxu0 0.0
    %1137 = vmatprep.subr.mxu0 0.0
    %1138 = vmatpush1.msra.mxu0 0.0
    %1139 = vmatprep.subr.mxu0 0.0
    %1140 = vmatpush1.msra.mxu0 0.0
    %1141 = vmatprep.subr.mxu0 0.0
    %1142 = vmatpush1.msra.mxu0 0.0
    %1143 = vmatprep.subr.mxu0 0.0
    %1144 = vmatpush1.msra.mxu0 0.0
    %1145 = vmatprep.subr.mxu0 0.0
    %1146 = vmatpush1.msra.mxu0 0.0
    %1147 = vmatprep.subr.mxu0 0.0
    %1148 = vmatpush1.msra.mxu0 0.0
    %1149 = vmatprep.subr.mxu0 0.0
    %1150 = vmatpush1.msra.mxu0 0.0
    %1151 = vmatprep.subr.mxu0 0.0
    %1152 = vmatpush1.msra.mxu0 0.0
    %1153 = vmatprep.subr.mxu0 0.0
    %1154 = vmatpush1.msra.mxu0 0.0
    %1155 = vmatprep.subr.mxu0 0.0
    %1156 = vmatpush1.msra.mxu0 0.0
    %1157 = vmatprep.subr.mxu0 0.0
    %1158 = vmatpush1.msra.mxu0 0.0
    %1159 = vmatprep.subr.mxu0 0.0
    %1160 = vmatpush1.msra.mxu0 0.0
    %1161 = vmatprep.subr.mxu0 0.0
    %1162 = vmatpush1.msra.mxu0 0.0
    %1163 = vmatprep.subr.mxu0 0.0
    %1164 = vmatpush1.msra.mxu0 0.0
    %1165 = vmatprep.subr.mxu0 0.0
    %1166 = vmatpush1.msra.mxu0 0.0
    %1167 = vmatprep.subr.mxu0 0.0
    %1168 = vmatpush1.msra.mxu0 0.0
    %1169 = vmatprep.subr.mxu0 0.0
    %1170 = vmatpush1.msra.mxu0 0.0
    %1171 = vmatprep.subr.mxu0 0.0
    %1172 = vmatpush1.msra.mxu0 0.0
    %1173 = vmatprep.subr.mxu0 0.0
    %1174 = vmatpush1.msra.mxu0 0.0
    %1175 = vmatprep.subr.mxu0 0.0
    %1176 = vmatpush1.msra.mxu0 0.0
    %1177 = vmatprep.subr.mxu0 0.0
    %1178 = vmatpush1.msra.mxu0 0.0
    %1179 = vmatprep.subr.mxu0 0.0
    %1180 = vmatpush1.msra.mxu0 0.0
    %1181 = vmatprep.subr.mxu0 0.0
    %1182 = vmatpush1.msra.mxu0 0.0
    %1183 = vmatprep.mubr.f32.mxu0 0.0
    %1184 = vmatmul.mubr.f32.gmra.mrb[0].mxu0 %v1117
    %v1185 = vpop.f32.mrb[0].mxu0
    %v1186 = vadd.f32 0.0, %v1185
    %v1187 = vpop.f32.mrb[0].mxu0
    %1188 = vdwg.mxu0
    %v1190 = vrot.slane %v1186, 1
    %v1193 = vadd.f32 %v1109, %v1186
    %v1194 = vadd.f32 %v1110, %v1190
    %v1195 = vxor.u32 %v1193, 2147483648
    %v1196 = vxor.u32 %v1194, 2147483648
    %v1197 = vmul.f32 %v1195, 1.442695
    %v1198 = vpow.pop %v1197
    %v1199 = vmul.f32 %v1196, 1.442695
    %v1200 = vpow.pop %v1199
    %v1201 = vadd.f32 %v1198, 1.0
    %v1202 = vadd.f32 %v1200, 1.0
    %v1203 = vrcp.pop %v1201
    %v1204 = vmul.f32 1.0, %v1203
    %v1205 = vrcp.pop %v1202
    %v1206 = vmul.f32 1.0, %v1205
    %v1207 = vtanh.pop %v1193
    %v1208 = vtanh.pop %v1194
    %v1209 = vmul.f32 %v1204, %v1095
    %v1210 = vmul.f32 %v1206, %v1096
    %1213 = vrot.lane.b32.xlu0 %v1207, 32
    %v1214 = vpop.permute.xlu0 %1213
    %1215 = vrot.lane.b32.xlu0 %v1208, 32
    %v1216 = vpop.permute.xlu0 %1215
    %v1219 = vmul.f32 %v1204, %v1214
    %v1220 = vmul.f32 %v1206, %v1216
    %1223 = vrot.lane.b32.xlu0 %v1219, 32
    %v1224 = vpop.permute.xlu0 %1223
    %1225 = vrot.lane.b32.xlu0 %v1220, 32
    %v1226 = vpop.permute.xlu0 %1225
    %v1229 = vadd.f32 %v1209, %v1224
    %v1230 = vadd.f32 %v1210, %v1226
    %v1231 = vtanh.pop %v1229
    %v1232 = vtanh.pop %v1230
    %1235 = vrot.lane.b32.xlu0 %v1231, 32
    %v1236 = vpop.permute.xlu0 %1235
    %1237 = vrot.lane.b32.xlu0 %v1232, 32
    %v1238 = vpop.permute.xlu0 %1237
    %v1241 = vmul.f32 %v1204, %v1236
    %v1242 = vmul.f32 %v1206, %v1238
    %v1243 = vld [vmem:[#allocation8] sm:$0xff]
    %v1244 = vld [vmem:[#allocation8 + $0x8] sm:$0xff]
    %v1245 = vld [vmem:[#allocation8 + $0x10] sm:$0xff]
    %v1246 = vld [vmem:[#allocation8 + $0x18] sm:$0xff]
    %v1247 = vld [vmem:[%s5] sm:$0xff]
    %v1248 = vld [vmem:[%s5 + $0x8] sm:$0xff]
    %v1249 = vld [vmem:[%s5 + $0x10] sm:$0xff]
    %v1250 = vld [vmem:[%s5 + $0x18] sm:$0xff]
    %v1253 = vrot.slane %v1242, 7
    %v1254 = vsel %vm309, %v1253, %v1241
    %1255 = vrot.lane.b32.xlu0 %v1254, 64
    %v1256 = vpop.permute.xlu0 %1255
    %v1257 = vsel %vm87, %v1256, 0
    %1259 = vmatprep.subr.mxu0 0.0
    %1260 = vmatpush1.msra.mxu0 %v1247
    %1261 = vmatprep.subr.mxu0 0.0
    %1262 = vmatpush1.msra.mxu0 %v1248
    %1263 = vmatprep.subr.mxu0 0.0
    %1264 = vmatpush1.msra.mxu0 %v1249
    %1265 = vmatprep.subr.mxu0 0.0
    %1266 = vmatpush1.msra.mxu0 %v1250
    %1267 = vmatprep.subr.mxu0 0.0
    %1268 = vmatpush1.msra.mxu0 0.0
    %1269 = vmatprep.subr.mxu0 0.0
    %1270 = vmatpush1.msra.mxu0 0.0
    %1271 = vmatprep.subr.mxu0 0.0
    %1272 = vmatpush1.msra.mxu0 0.0
    %1273 = vmatprep.subr.mxu0 0.0
    %1274 = vmatpush1.msra.mxu0 0.0
    %1275 = vmatprep.subr.mxu0 0.0
    %1276 = vmatpush1.msra.mxu0 0.0
    %1277 = vmatprep.subr.mxu0 0.0
    %1278 = vmatpush1.msra.mxu0 0.0
    %1279 = vmatprep.subr.mxu0 0.0
    %1280 = vmatpush1.msra.mxu0 0.0
    %1281 = vmatprep.subr.mxu0 0.0
    %1282 = vmatpush1.msra.mxu0 0.0
    %1283 = vmatprep.subr.mxu0 0.0
    %1284 = vmatpush1.msra.mxu0 0.0
    %1285 = vmatprep.subr.mxu0 0.0
    %1286 = vmatpush1.msra.mxu0 0.0
    %1287 = vmatprep.subr.mxu0 0.0
    %1288 = vmatpush1.msra.mxu0 0.0
    %1289 = vmatprep.subr.mxu0 0.0
    %1290 = vmatpush1.msra.mxu0 0.0
    %1291 = vmatprep.subr.mxu0 0.0
    %1292 = vmatpush1.msra.mxu0 0.0
    %1293 = vmatprep.subr.mxu0 0.0
    %1294 = vmatpush1.msra.mxu0 0.0
    %1295 = vmatprep.subr.mxu0 0.0
    %1296 = vmatpush1.msra.mxu0 0.0
    %1297 = vmatprep.subr.mxu0 0.0
    %1298 = vmatpush1.msra.mxu0 0.0
    %1299 = vmatprep.subr.mxu0 0.0
    %1300 = vmatpush1.msra.mxu0 0.0
    %1301 = vmatprep.subr.mxu0 0.0
    %1302 = vmatpush1.msra.mxu0 0.0
    %1303 = vmatprep.subr.mxu0 0.0
    %1304 = vmatpush1.msra.mxu0 0.0
    %1305 = vmatprep.subr.mxu0 0.0
    %1306 = vmatpush1.msra.mxu0 0.0
    %1307 = vmatprep.subr.mxu0 0.0
    %1308 = vmatpush1.msra.mxu0 0.0
    %1309 = vmatprep.subr.mxu0 0.0
    %1310 = vmatpush1.msra.mxu0 0.0
    %1311 = vmatprep.subr.mxu0 0.0
    %1312 = vmatpush1.msra.mxu0 0.0
    %1313 = vmatprep.subr.mxu0 0.0
    %1314 = vmatpush1.msra.mxu0 0.0
    %1315 = vmatprep.subr.mxu0 0.0
    %1316 = vmatpush1.msra.mxu0 0.0
    %1317 = vmatprep.subr.mxu0 0.0
    %1318 = vmatpush1.msra.mxu0 0.0
    %1319 = vmatprep.subr.mxu0 0.0
    %1320 = vmatpush1.msra.mxu0 0.0
    %1321 = vmatprep.subr.mxu0 0.0
    %1322 = vmatpush1.msra.mxu0 0.0
    %1323 = vmatprep.mubr.f32.mxu0 0.0
    %1324 = vmatmul.mubr.f32.gmra.mrb[0].mxu0 %v1257
    %v1325 = vpop.f32.mrb[0].mxu0
    %v1326 = vadd.f32 0.0, %v1325
    %v1327 = vpop.f32.mrb[0].mxu0
    %1328 = vdwg.mxu0
    %v1329 = vrot.slane %v74, 7
    %v1330 = vrot.slane %v75, 6
    %v1331 = vsel %vm309, %v1330, %v1329
    %v1332 = vsel %vm87, %v1331, 0
    %1334 = vmatprep.subr.mxu0 0.0
    %1335 = vmatpush1.msra.mxu0 %v1243
    %1336 = vmatprep.subr.mxu0 0.0
    %1337 = vmatpush1.msra.mxu0 %v1244
    %1338 = vmatprep.subr.mxu0 0.0
    %1339 = vmatpush1.msra.mxu0 %v1245
    %1340 = vmatprep.subr.mxu0 0.0
    %1341 = vmatpush1.msra.mxu0 %v1246
    %1342 = vmatprep.subr.mxu0 0.0
    %1343 = vmatpush1.msra.mxu0 0.0
    %1344 = vmatprep.subr.mxu0 0.0
    %1345 = vmatpush1.msra.mxu0 0.0
    %1346 = vmatprep.subr.mxu0 0.0
    %1347 = vmatpush1.msra.mxu0 0.0
    %1348 = vmatprep.subr.mxu0 0.0
    %1349 = vmatpush1.msra.mxu0 0.0
    %1350 = vmatprep.subr.mxu0 0.0
    %1351 = vmatpush1.msra.mxu0 0.0
    %1352 = vmatprep.subr.mxu0 0.0
    %1353 = vmatpush1.msra.mxu0 0.0
    %1354 = vmatprep.subr.mxu0 0.0
    %1355 = vmatpush1.msra.mxu0 0.0
    %1356 = vmatprep.subr.mxu0 0.0
    %1357 = vmatpush1.msra.mxu0 0.0
    %1358 = vmatprep.subr.mxu0 0.0
    %1359 = vmatpush1.msra.mxu0 0.0
    %1360 = vmatprep.subr.mxu0 0.0
    %1361 = vmatpush1.msra.mxu0 0.0
    %1362 = vmatprep.subr.mxu0 0.0
    %1363 = vmatpush1.msra.mxu0 0.0
    %1364 = vmatprep.subr.mxu0 0.0
    %1365 = vmatpush1.msra.mxu0 0.0
    %1366 = vmatprep.subr.mxu0 0.0
    %1367 = vmatpush1.msra.mxu0 0.0
    %1368 = vmatprep.subr.mxu0 0.0
    %1369 = vmatpush1.msra.mxu0 0.0
    %1370 = vmatprep.subr.mxu0 0.0
    %1371 = vmatpush1.msra.mxu0 0.0
    %1372 = vmatprep.subr.mxu0 0.0
    %1373 = vmatpush1.msra.mxu0 0.0
    %1374 = vmatprep.subr.mxu0 0.0
    %1375 = vmatpush1.msra.mxu0 0.0
    %1376 = vmatprep.subr.mxu0 0.0
    %1377 = vmatpush1.msra.mxu0 0.0
    %1378 = vmatprep.subr.mxu0 0.0
    %1379 = vmatpush1.msra.mxu0 0.0
    %1380 = vmatprep.subr.mxu0 0.0
    %1381 = vmatpush1.msra.mxu0 0.0
    %1382 = vmatprep.subr.mxu0 0.0
    %1383 = vmatpush1.msra.mxu0 0.0
    %1384 = vmatprep.subr.mxu0 0.0
    %1385 = vmatpush1.msra.mxu0 0.0
    %1386 = vmatprep.subr.mxu0 0.0
    %1387 = vmatpush1.msra.mxu0 0.0
    %1388 = vmatprep.subr.mxu0 0.0
    %1389 = vmatpush1.msra.mxu0 0.0
    %1390 = vmatprep.subr.mxu0 0.0
    %1391 = vmatpush1.msra.mxu0 0.0
    %1392 = vmatprep.subr.mxu0 0.0
    %1393 = vmatpush1.msra.mxu0 0.0
    %1394 = vmatprep.subr.mxu0 0.0
    %1395 = vmatpush1.msra.mxu0 0.0
    %1396 = vmatprep.subr.mxu0 0.0
    %1397 = vmatpush1.msra.mxu0 0.0
    %1398 = vmatprep.mubr.f32.mxu0 0.0
    %1399 = vmatmul.mubr.f32.gmra.mrb[0].mxu0 %v1332
    %v1400 = vpop.f32.mrb[0].mxu0
    %v1401 = vadd.f32 %v1326, %v1400
    %v1402 = vpop.f32.mrb[0].mxu0
    %1403 = vdwg.mxu0
    %v1404 = vld [vmem:[%s6] sm:$0x1]
    %v1406 = vlaneseq
    %v1407 = vshrl.u32 %v1406, 7
    %v1408 = vsub.s32 0, %v1407
    %v1409 = vrot.slane %v1404, %v1408
    %v1411 = vadd.f32 %v1401, %v1409
    %v1412 = vxor.u32 %v1411, 2147483648
    %v1413 = vmul.f32 %v1412, 1.442695
    %v1414 = vpow.pop %v1413
    %v1415 = vadd.f32 %v1414, 1.0
    %v1416 = vrcp.pop %v1415
    %v1417 = vmul.f32 1.0, %v1416
    %v1418 = vtanh.pop %v1411
    %v1421 = vrot.slane %v1230, 7
    %v1422 = vsel %vm309, %v1421, %v1229
    %v1424 = vmul.f32 %v1417, %v1422
    %1426 = vrot.lane.b32.xlu0 %v1418, 32
    %v1427 = vpop.permute.xlu0 %1426
    %v1429 = vmul.f32 %v1417, %v1427
    %1431 = vrot.lane.b32.xlu0 %v1429, 32
    %v1432 = vpop.permute.xlu0 %1431
    %v1434 = vadd.f32 %v1424, %v1432
    %v1435 = vtanh.pop %v1434
    %1437 = vrot.lane.b32.xlu0 %v1435, 32
    %v1438 = vpop.permute.xlu0 %1437
    %v1440 = vmul.f32 %v1417, %v1438
    %v1441 = vld [vmem:[%s7] sm:$0xff]
    %v1442 = vld [vmem:[%s7 + $0x8] sm:$0xff]
    %v1443 = vld [vmem:[%s7 + $0x10] sm:$0xff]
    %v1444 = vld [vmem:[%s7 + $0x18] sm:$0xff]
    %v1445 = vld [vmem:[%s8] sm:$0x1]
    %v1447 = vlaneseq
    %v1448 = vshrl.u32 %v1447, 7
    %v1449 = vsub.s32 0, %v1448
    %v1450 = vrot.slane %v1445, %v1449
    %1453 = vrot.lane.b32.xlu0 %v1440, 64
    %v1454 = vpop.permute.xlu0 %1453
    %v1455 = vsel %vm87, %v1454, 0
    %1457 = vmatprep.subr.mxu0 0.0
    %1458 = vmatpush1.msra.mxu0 %v1441
    %1459 = vmatprep.subr.mxu0 0.0
    %1460 = vmatpush1.msra.mxu0 %v1442
    %1461 = vmatprep.subr.mxu0 0.0
    %1462 = vmatpush1.msra.mxu0 %v1443
    %1463 = vmatprep.subr.mxu0 0.0
    %1464 = vmatpush1.msra.mxu0 %v1444
    %1465 = vmatprep.subr.mxu0 0.0
    %1466 = vmatpush1.msra.mxu0 0.0
    %1467 = vmatprep.subr.mxu0 0.0
    %1468 = vmatpush1.msra.mxu0 0.0
    %1469 = vmatprep.subr.mxu0 0.0
    %1470 = vmatpush1.msra.mxu0 0.0
    %1471 = vmatprep.subr.mxu0 0.0
    %1472 = vmatpush1.msra.mxu0 0.0
    %1473 = vmatprep.subr.mxu0 0.0
    %1474 = vmatpush1.msra.mxu0 0.0
    %1475 = vmatprep.subr.mxu0 0.0
    %1476 = vmatpush1.msra.mxu0 0.0
    %1477 = vmatprep.subr.mxu0 0.0
    %1478 = vmatpush1.msra.mxu0 0.0
    %1479 = vmatprep.subr.mxu0 0.0
    %1480 = vmatpush1.msra.mxu0 0.0
    %1481 = vmatprep.subr.mxu0 0.0
    %1482 = vmatpush1.msra.mxu0 0.0
    %1483 = vmatprep.subr.mxu0 0.0
    %1484 = vmatpush1.msra.mxu0 0.0
    %1485 = vmatprep.subr.mxu0 0.0
    %1486 = vmatpush1.msra.mxu0 0.0
    %1487 = vmatprep.subr.mxu0 0.0
    %1488 = vmatpush1.msra.mxu0 0.0
    %1489 = vmatprep.subr.mxu0 0.0
    %1490 = vmatpush1.msra.mxu0 0.0
    %1491 = vmatprep.subr.mxu0 0.0
    %1492 = vmatpush1.msra.mxu0 0.0
    %1493 = vmatprep.subr.mxu0 0.0
    %1494 = vmatpush1.msra.mxu0 0.0
    %1495 = vmatprep.subr.mxu0 0.0
    %1496 = vmatpush1.msra.mxu0 0.0
    %1497 = vmatprep.subr.mxu0 0.0
    %1498 = vmatpush1.msra.mxu0 0.0
    %1499 = vmatprep.subr.mxu0 0.0
    %1500 = vmatpush1.msra.mxu0 0.0
    %1501 = vmatprep.subr.mxu0 0.0
    %1502 = vmatpush1.msra.mxu0 0.0
    %1503 = vmatprep.subr.mxu0 0.0
    %1504 = vmatpush1.msra.mxu0 0.0
    %1505 = vmatprep.subr.mxu0 0.0
    %1506 = vmatpush1.msra.mxu0 0.0
    %1507 = vmatprep.subr.mxu0 0.0
    %1508 = vmatpush1.msra.mxu0 0.0
    %1509 = vmatprep.subr.mxu0 0.0
    %1510 = vmatpush1.msra.mxu0 0.0
    %1511 = vmatprep.subr.mxu0 0.0
    %1512 = vmatpush1.msra.mxu0 0.0
    %1513 = vmatprep.subr.mxu0 0.0
    %1514 = vmatpush1.msra.mxu0 0.0
    %1515 = vmatprep.subr.mxu0 0.0
    %1516 = vmatpush1.msra.mxu0 0.0
    %1517 = vmatprep.subr.mxu0 0.0
    %1518 = vmatpush1.msra.mxu0 0.0
    %1519 = vmatprep.subr.mxu0 0.0
    %1520 = vmatpush1.msra.mxu0 0.0
    %1521 = vmatprep.mubr.f32.mxu0 0.0
    %1522 = vmatmul.mubr.f32.gmra.mrb[0].mxu0 %v1455
    %v1523 = vpop.f32.mrb[0].mxu0
    %v1524 = vadd.f32 %v1450, %v1523
    %v1525 = vpop.f32.mrb[0].mxu0
    %1526 = vdwg.mxu0
    %vm1527 = vcmask 123904
    %1528 = vst.msk [vmem:[#allocation9] sm:$0x3] %vm1527, %v1524
    // Predicated region
    $region50: #{tpu_custom_call.1} parent=1 // pred_check
      _
    $region51: #{tpu_custom_call.1} parent=1 // pred_check_branch
      %1530 = sbr.rel (0) target = $region53
    $region52: #{tpu_custom_call.1} parent=1 // pred_region
      %s1532 = ssub.s32 32, 32
      %1533 = vsyncadd [#allocation5], %s1532
      %s1535 = sshll.u32 [#allocation9], 4
      %s1536 = int_to_ptr.vmem [resolvable:$true] %s1535
      %1538 = dma.vmem_to_hbm [thread:$0]  %s1536, 32, %s9, [#allocation5]
    $region53: #{tpu_custom_call.1} parent=1 // pred_fallthru
      _
    // Predicated region
    $region54: #{tpu_custom_call.1} parent=1 // pred_check
      _
    $region55: #{tpu_custom_call.1} parent=1 // pred_check_branch
      %1540 = sbr.rel (0) target = $region57
    $region56: #{tpu_custom_call.1} parent=1 // pred_region
      %1541 = dma.done [#allocation5], 32
    $region57: #{tpu_custom_call.1} parent=1 // pred_fallthru
      _
    %1542 = vsyncpa [#allocation4], 1
    %1543 = vsyncpa [#allocation7], 1
    %1544 = vsyncpa [#allocation5], 1

</llo_original>
